<compile_context>
chip_gen: v5e
topology: v5e:2x2
jax: 0.10.0
libtpu: 0.0.40
codegen_flags: <defaults>
</compile_context>

<pallas_src>
import math

import jax
import jax.numpy as jnp
from jax import lax
from jax.experimental import pallas as pl
from jax.experimental.pallas import tpu as pltpu

# ---- small shapes consistent with the module ----
B, C, H, W = 2, 4, 16, 16          # batch, in_channels, image_size
HID = 16                           # hidden channels of the tiny denoiser
EMB = 16                           # sinusoidal time-embedding dim
TIMESTEPS = 16
KH = KW = 3
HW = H * W                         # 256 (spatial, on lanes)
BHW = B * HW                       # 512 (batch folded into lanes)

W_BITS = 4                         # log2(W)
HW_BITS = 8                        # log2(H*W)
assert (1 << W_BITS) == W and (1 << HW_BITS) == HW


# ------------------------- fused Pallas kernel -------------------------

def _fused_diffusion_kernel(t_ref, sac_ref, somac_ref,          # SMEM scalar tables
                            x_ref, noise_ref,                    # (B, C, HW) VMEM
                            w1_ref, b1_ref, w2_ref, b2_ref,      # conv weights (im2col layout)
                            ttab_ref,                            # (HID, T) time-emb table
                            loss_ref,                            # (1, 1) output
                            p1_ref, p2_ref):                     # im2col scratch
    # Lane-coordinate helpers: global lane position -> (batch, y, x).
    pos = lax.broadcasted_iota(jnp.int32, (1, BHW), 1)
    px = jnp.bitwise_and(pos, W - 1)
    py = jnp.bitwise_and(pos >> W_BITS, H - 1)
    bidx = pos >> HW_BITS

    # Border masks for the 9 taps of a 3x3 "same" conv (shared by both convs).
    taps = []
    for k in range(KH * KW):
        dy, dx = k // KW - 1, k % KW - 1
        off = dy * W + dx
        if off == 0:
            taps.append((off, None))
        else:
            valid = (py >= -dy) & (py < H - dy) & (px >= -dx) & (px < W - dx)
            taps.append((off, valid))

    # Per-batch diffusion scalars from SMEM, broadcast across that batch's lanes.
    sac_vec = jnp.zeros((1, BHW), jnp.float32)
    somac_vec = jnp.zeros((1, BHW), jnp.float32)
    t_lane = jnp.zeros((1, BHW), jnp.int32)
    for b in range(B):
        in_b = bidx == b
        sac_vec = jnp.where(in_b, sac_ref[t_ref[b]], sac_vec)
        somac_vec = jnp.where(in_b, somac_ref[t_ref[b]], somac_vec)
        t_lane = jnp.where(in_b, t_ref[b], t_lane)

    # Time-embedding columns selected via an exact one-hot matmul.
    # (tiny 16x16x512 matmul; HIGHEST precision keeps the selection bit-exact)
    tiota = lax.broadcasted_iota(jnp.int32, (TIMESTEPS, 1), 0)
    onehot = (tiota == t_lane).astype(jnp.float32)                     # (T, BHW)
    temb = jnp.dot(ttab_ref[...], onehot,
                   precision=lax.Precision.HIGHEST,
                   preferred_element_type=jnp.float32)                 # (HID, BHW)

    # q_sample in (C, B*HW) layout: x_noisy = sqrt(ac)*x + sqrt(1-ac)*noise.
    x_all = jnp.concatenate([x_ref[b] for b in range(B)], axis=1)      # (C, BHW)
    n_all = jnp.concatenate([noise_ref[b] for b in range(B)], axis=1)  # (C, BHW)
    xn = sac_vec * x_all + somac_vec * n_all                           # (C, BHW)

    # ---- conv1 (3x3 "same", C -> HID) as one im2col matmul --------------------
    for k, (off, valid) in enumerate(taps):
        sh = xn if off == 0 else jnp.roll(xn, -off, axis=1)
        p1_ref[k * C:(k + 1) * C, :] = sh if valid is None else jnp.where(valid, sh, 0.0)
    h = jnp.dot(w1_ref[...], p1_ref[...],
                preferred_element_type=jnp.float32)                    # (HID, BHW)
    h = h + b1_ref[...] + temb
    h = h * jax.nn.sigmoid(h)                                          # SiLU

    # ---- conv2 (3x3 "same", HID -> C) as one im2col matmul --------------------
    for k, (off, valid) in enumerate(taps):
        sh = h if off == 0 else jnp.roll(h, -off, axis=1)
        p2_ref[k * HID:(k + 1) * HID, :] = sh if valid is None else jnp.where(valid, sh, 0.0)
    pred = jnp.dot(w2_ref[...], p2_ref[...],
                   preferred_element_type=jnp.float32)                 # (C, BHW)
    pred = pred + b2_ref[...]

    # ---- plain (unweighted) MSE over all elements, like F.mse_loss ------------
    diff = n_all - pred
    loss_ref[...] = (jnp.sum(diff * diff) * (1.0 / float(B * C * HW))).reshape(1, 1)


# ------------------------- parameters -------------------------

def make_params(key):
    """Deterministic init of the tiny denoiser + diffusion buffers."""
    k1, k2, k3 = jax.random.split(key, 3)
    w1 = 0.1 * jax.random.normal(k1, (KH * KW, C, HID), jnp.float32)   # [tap, cin, cout]
    b1 = 0.01 * jnp.ones((HID,), jnp.float32)
    w2 = 0.1 * jax.random.normal(k2, (KH * KW, HID, C), jnp.float32)
    b2 = 0.01 * jnp.ones((C,), jnp.float32)
    w_t = 0.1 * jax.random.normal(k3, (HID, EMB), jnp.float32)         # time-MLP weight
    b_t = 0.01 * jnp.ones((HID,), jnp.float32)

    # linear beta schedule (beta_end=0.02), as in DiffusionModelTest.__init__
    betas = jnp.linspace(1e-4, 0.02, TIMESTEPS, dtype=jnp.float32)
    alphas = 1.0 - betas
    ac = jnp.cumprod(alphas)

    # Time-embedding MLP output precomputed for every discrete timestep (exact,
    # since t in [0, T) is discrete) -> no per-call XLA dispatch for it.
    half = EMB // 2
    freqs = jnp.exp(jnp.arange(half, dtype=jnp.float32)
                    * (-math.log(10000.0) / (half - 1)))
    ang = jnp.arange(TIMESTEPS, dtype=jnp.float32)[:, None] * freqs[None, :]
    emb = jnp.concatenate([jnp.sin(ang), jnp.cos(ang)], axis=-1)       # (T, EMB)
    temb = jnp.dot(emb, w_t.T, precision=lax.Precision.HIGHEST) + b_t[None, :]
    temb = temb * jax.nn.sigmoid(temb)                                 # (T, HID)

    return {
        # canonical parameters (used by the reference)
        "w1": w1, "b1": b1, "w2": w2, "b2": b2, "w_t": w_t, "b_t": b_t,
        "sqrt_alphas_cumprod": jnp.sqrt(ac),
        "sqrt_one_minus_alphas_cumprod": jnp.sqrt(1.0 - ac),
        # kernel-side layouts (im2col / column-broadcast forms)
        "w1_mat": jnp.transpose(w1, (2, 0, 1)).reshape(HID, KH * KW * C),   # [o, k*C+c]
        "b1_col": b1.reshape(HID, 1),
        "w2_mat": jnp.transpose(w2, (2, 0, 1)).reshape(C, KH * KW * HID),   # [o, k*HID+i]
        "b2_col": b2.reshape(C, 1),
        "temb_table_t": temb.T,                                             # (HID, T)
    }


# ------------------------- forward wrapper -------------------------

def diffusion_forward(x_nchw, params, key):
    """DiffusionModelTest.forward (classes=None). Returns (scalar loss, aux)."""
    x = x_nchw.reshape(B, C, HW).astype(jnp.float32)        # free reshape, NCHW-native layout
    k_t, k_n = jax.random.split(key)
    t = jax.random.randint(k_t, (B,), 0, TIMESTEPS, dtype=jnp.int32)
    noise = jax.random.normal(k_n, (B, C, HW), jnp.float32)

    loss2d = pl.pallas_call(
        _fused_diffusion_kernel,
        out_shape=jax.ShapeDtypeStruct((1, 1), jnp.float32),
        grid=(1,),
        in_specs=[
            pl.BlockSpec(memory_space=pltpu.MemorySpace.SMEM),          # t
            pl.BlockSpec(memory_space=pltpu.MemorySpace.SMEM),          # sqrt_alphas_cumprod
            pl.BlockSpec(memory_space=pltpu.MemorySpace.SMEM),          # sqrt_1m_alphas_cumprod
            pl.BlockSpec((B, C, HW), lambda i: (0, 0, 0)),              # x
            pl.BlockSpec((B, C, HW), lambda i: (0, 0, 0)),              # noise
            pl.BlockSpec((HID, KH * KW * C), lambda i: (0, 0)),         # w1 (im2col layout)
            pl.BlockSpec((HID, 1), lambda i: (0, 0)),                   # b1
            pl.BlockSpec((C, KH * KW * HID), lambda i: (0, 0)),         # w2 (im2col layout)
            pl.BlockSpec((C, 1), lambda i: (0, 0)),                     # b2
            pl.BlockSpec((HID, TIMESTEPS), lambda i: (0, 0)),           # temb table (HID, T)
        ],
        out_specs=pl.BlockSpec((1, 1), lambda i: (0, 0)),
        scratch_shapes=[
            pltpu.VMEM((KH * KW * C, BHW), jnp.float32),                # conv1 im2col patches
            pltpu.VMEM((KH * KW * HID, BHW), jnp.float32),              # conv2 im2col patches
        ],
        compiler_params=pltpu.CompilerParams(dimension_semantics=("arbitrary",)),
    )(t, params["sqrt_alphas_cumprod"], params["sqrt_one_minus_alphas_cumprod"],
      x, noise, params["w1_mat"], params["b1_col"],
      params["w2_mat"], params["b2_col"], params["temb_table_t"])

    loss = loss2d[0, 0]
    aux = (x_nchw, noise.reshape(B, C, H, W), t)
    return loss, aux


# ------------------------- pure-JAX reference -------------------------

def reference_loss(x, noise, t, params):
    """Same math in plain JAX/XLA (NCHW convs, default TPU matmul precision)."""
    sac = params["sqrt_alphas_cumprod"][t].reshape(B, 1, 1, 1)
    somac = params["sqrt_one_minus_alphas_cumprod"][t].reshape(B, 1, 1, 1)
    x_noisy = sac * x + somac * noise

    half = EMB // 2
    freqs = jnp.exp(jnp.arange(half, dtype=jnp.float32)
                    * (-math.log(10000.0) / (half - 1)))
    ang = t.astype(jnp.float32)[:, None] * freqs[None, :]
    emb = jnp.concatenate([jnp.sin(ang), jnp.cos(ang)], axis=-1)        # (B, EMB)
    temb = jnp.dot(emb, params["w_t"].T,
                   precision=lax.Precision.HIGHEST) + params["b_t"][None, :]
    temb = temb * jax.nn.sigmoid(temb)                                  # (B, HID)

    w1 = jnp.transpose(params["w1"].reshape(KH, KW, C, HID), (3, 2, 0, 1))   # OIHW
    h = lax.conv_general_dilated(x_noisy, w1, (1, 1), "SAME",
                                 dimension_numbers=("NCHW", "OIHW", "NCHW"))
    h = h + params["b1"].reshape(1, HID, 1, 1) + temb.reshape(B, HID, 1, 1)
    h = h * jax.nn.sigmoid(h)

    w2 = jnp.transpose(params["w2"].reshape(KH, KW, HID, C), (3, 2, 0, 1))
    pred = lax.conv_general_dilated(h, w2, (1, 1), "SAME",
                                    dimension_numbers=("NCHW", "OIHW", "NCHW"))
    pred = pred + params["b2"].reshape(1, C, 1, 1)
    return jnp.mean((noise - pred) ** 2)          # F.mse_loss(noise, pred_noise)


# ------------------------- main -------------------------

if __name__ == "__main__":
    root = jax.random.PRNGKey(0)
    k_param, k_x, k_fwd = jax.random.split(root, 3)

    params = make_params(k_param)
    x_nchw = jax.random.normal(k_x, (B, C, H, W), jnp.float32)   # PyTorch NCHW input

    fwd = jax.jit(diffusion_forward)
    loss, (x_chk, noise, t) = fwd(x_nchw, params, k_fwd)
    loss = jax.block_until_ready(loss)

    ref = jax.block_until_ready(reference_loss(x_chk, noise, t, params))
    assert jnp.isfinite(loss), "non-finite loss"
    assert jnp.allclose(loss, ref, rtol=2e-3, atol=1e-4), (float(loss), float(ref))

    print("KERNEL_OK")
</pallas_src>

<mosaic_0001>
module attributes {stable_mosaic.version = 11 : i64} {
  func.func @_fused_diffusion_kernel(%arg0: i32, %arg1: memref<2xi32, #tpu.memory_space<smem>>, %arg2: memref<16xf32, #tpu.memory_space<smem>>, %arg3: memref<16xf32, #tpu.memory_space<smem>>, %arg4: memref<2x4x256xf32, #tpu.memory_space<vmem>>, %arg5: memref<2x4x256xf32, #tpu.memory_space<vmem>>, %arg6: memref<16x36xf32, #tpu.memory_space<vmem>>, %arg7: memref<16x1xf32, #tpu.memory_space<vmem>>, %arg8: memref<4x144xf32, #tpu.memory_space<vmem>>, %arg9: memref<4x1xf32, #tpu.memory_space<vmem>>, %arg10: memref<16x16xf32, #tpu.memory_space<vmem>>, %arg11: memref<1x1xf32, #tpu.memory_space<vmem>>, %arg12: memref<36x512xf32, #tpu.memory_space<vmem>>, %arg13: memref<144x512xf32, #tpu.memory_space<vmem>>) attributes {dimension_semantics = [#tpu.dimension_semantics<arbitrary>], iteration_bounds = array<i64: 1>, scalar_prefetch = 0 : i64, scratch_operands = 2 : i64, tpu.core_type = #tpu.core_type<tc>, window_params = [{transform_indices = @transform_0, window_bounds = array<i64: 2>}, {transform_indices = @transform_1, window_bounds = array<i64: 16>}, {transform_indices = @transform_2, window_bounds = array<i64: 16>}, {pipeline_mode = #tpu.pipeline_mode<synchronous>, transform_indices = @transform_3, window_bounds = array<i64: 2, 4, 256>}, {pipeline_mode = #tpu.pipeline_mode<synchronous>, transform_indices = @transform_4, window_bounds = array<i64: 2, 4, 256>}, {pipeline_mode = #tpu.pipeline_mode<synchronous>, transform_indices = @transform_5, window_bounds = array<i64: 16, 36>}, {pipeline_mode = #tpu.pipeline_mode<synchronous>, transform_indices = @transform_6, window_bounds = array<i64: 16, 1>}, {pipeline_mode = #tpu.pipeline_mode<synchronous>, transform_indices = @transform_7, window_bounds = array<i64: 4, 144>}, {pipeline_mode = #tpu.pipeline_mode<synchronous>, transform_indices = @transform_8, window_bounds = array<i64: 4, 1>}, {pipeline_mode = #tpu.pipeline_mode<synchronous>, transform_indices = @transform_9, window_bounds = array<i64: 16, 16>}, {pipeline_mode = #tpu.pipeline_mode<synchronous>, transform_indices = @transform_10, window_bounds = array<i64: 1, 1>}]} {
    %0 = tpu.iota {dimensions = array<i32: 1>} : vector<1x512xi32>
    %c15_i32 = arith.constant 15 : i32
    %1 = vector.broadcast %c15_i32 : i32 to vector<1x512xi32>
    %2 = arith.andi %0, %1 : vector<1x512xi32>
    %c4_i32 = arith.constant 4 : i32
    %3 = vector.broadcast %c4_i32 : i32 to vector<1x512xi32>
    %4 = arith.shrsi %0, %3 : vector<1x512xi32>
    %c15_i32_0 = arith.constant 15 : i32
    %5 = vector.broadcast %c15_i32_0 : i32 to vector<1x512xi32>
    %6 = arith.andi %4, %5 : vector<1x512xi32>
    %c8_i32 = arith.constant 8 : i32
    %7 = vector.broadcast %c8_i32 : i32 to vector<1x512xi32>
    %8 = arith.shrsi %0, %7 : vector<1x512xi32>
    %c1_i32 = arith.constant 1 : i32
    %9 = vector.broadcast %c1_i32 : i32 to vector<1x512xi32>
    %10 = arith.cmpi sge, %6, %9 : vector<1x512xi32>
    %c17_i32 = arith.constant 17 : i32
    %11 = vector.broadcast %c17_i32 : i32 to vector<1x512xi32>
    %12 = arith.cmpi slt, %6, %11 : vector<1x512xi32>
    %13 = arith.andi %10, %12 : vector<1x512xi1>
    %c1_i32_1 = arith.constant 1 : i32
    %14 = vector.broadcast %c1_i32_1 : i32 to vector<1x512xi32>
    %15 = arith.cmpi sge, %2, %14 : vector<1x512xi32>
    %16 = arith.andi %13, %15 : vector<1x512xi1>
    %c17_i32_2 = arith.constant 17 : i32
    %17 = vector.broadcast %c17_i32_2 : i32 to vector<1x512xi32>
    %18 = arith.cmpi slt, %2, %17 : vector<1x512xi32>
    %19 = arith.andi %16, %18 : vector<1x512xi1>
    %c1_i32_3 = arith.constant 1 : i32
    %20 = vector.broadcast %c1_i32_3 : i32 to vector<1x512xi32>
    %21 = arith.cmpi sge, %6, %20 : vector<1x512xi32>
    %c17_i32_4 = arith.constant 17 : i32
    %22 = vector.broadcast %c17_i32_4 : i32 to vector<1x512xi32>
    %23 = arith.cmpi slt, %6, %22 : vector<1x512xi32>
    %24 = arith.andi %21, %23 : vector<1x512xi1>
    %c0_i32 = arith.constant 0 : i32
    %25 = vector.broadcast %c0_i32 : i32 to vector<1x512xi32>
    %26 = arith.cmpi sge, %2, %25 : vector<1x512xi32>
    %27 = arith.andi %24, %26 : vector<1x512xi1>
    %c16_i32 = arith.constant 16 : i32
    %28 = vector.broadcast %c16_i32 : i32 to vector<1x512xi32>
    %29 = arith.cmpi slt, %2, %28 : vector<1x512xi32>
    %30 = arith.andi %27, %29 : vector<1x512xi1>
    %c1_i32_5 = arith.constant 1 : i32
    %31 = vector.broadcast %c1_i32_5 : i32 to vector<1x512xi32>
    %32 = arith.cmpi sge, %6, %31 : vector<1x512xi32>
    %c17_i32_6 = arith.constant 17 : i32
    %33 = vector.broadcast %c17_i32_6 : i32 to vector<1x512xi32>
    %34 = arith.cmpi slt, %6, %33 : vector<1x512xi32>
    %35 = arith.andi %32, %34 : vector<1x512xi1>
    %c-1_i32 = arith.constant -1 : i32
    %36 = vector.broadcast %c-1_i32 : i32 to vector<1x512xi32>
    %37 = arith.cmpi sge, %2, %36 : vector<1x512xi32>
    %38 = arith.andi %35, %37 : vector<1x512xi1>
    %c15_i32_7 = arith.constant 15 : i32
    %39 = vector.broadcast %c15_i32_7 : i32 to vector<1x512xi32>
    %40 = arith.cmpi slt, %2, %39 : vector<1x512xi32>
    %41 = arith.andi %38, %40 : vector<1x512xi1>
    %c0_i32_8 = arith.constant 0 : i32
    %42 = vector.broadcast %c0_i32_8 : i32 to vector<1x512xi32>
    %43 = arith.cmpi sge, %6, %42 : vector<1x512xi32>
    %c16_i32_9 = arith.constant 16 : i32
    %44 = vector.broadcast %c16_i32_9 : i32 to vector<1x512xi32>
    %45 = arith.cmpi slt, %6, %44 : vector<1x512xi32>
    %46 = arith.andi %43, %45 : vector<1x512xi1>
    %c1_i32_10 = arith.constant 1 : i32
    %47 = vector.broadcast %c1_i32_10 : i32 to vector<1x512xi32>
    %48 = arith.cmpi sge, %2, %47 : vector<1x512xi32>
    %49 = arith.andi %46, %48 : vector<1x512xi1>
    %c17_i32_11 = arith.constant 17 : i32
    %50 = vector.broadcast %c17_i32_11 : i32 to vector<1x512xi32>
    %51 = arith.cmpi slt, %2, %50 : vector<1x512xi32>
    %52 = arith.andi %49, %51 : vector<1x512xi1>
    %c0_i32_12 = arith.constant 0 : i32
    %53 = vector.broadcast %c0_i32_12 : i32 to vector<1x512xi32>
    %54 = arith.cmpi sge, %6, %53 : vector<1x512xi32>
    %c16_i32_13 = arith.constant 16 : i32
    %55 = vector.broadcast %c16_i32_13 : i32 to vector<1x512xi32>
    %56 = arith.cmpi slt, %6, %55 : vector<1x512xi32>
    %57 = arith.andi %54, %56 : vector<1x512xi1>
    %c-1_i32_14 = arith.constant -1 : i32
    %58 = vector.broadcast %c-1_i32_14 : i32 to vector<1x512xi32>
    %59 = arith.cmpi sge, %2, %58 : vector<1x512xi32>
    %60 = arith.andi %57, %59 : vector<1x512xi1>
    %c15_i32_15 = arith.constant 15 : i32
    %61 = vector.broadcast %c15_i32_15 : i32 to vector<1x512xi32>
    %62 = arith.cmpi slt, %2, %61 : vector<1x512xi32>
    %63 = arith.andi %60, %62 : vector<1x512xi1>
    %c-1_i32_16 = arith.constant -1 : i32
    %64 = vector.broadcast %c-1_i32_16 : i32 to vector<1x512xi32>
    %65 = arith.cmpi sge, %6, %64 : vector<1x512xi32>
    %c15_i32_17 = arith.constant 15 : i32
    %66 = vector.broadcast %c15_i32_17 : i32 to vector<1x512xi32>
    %67 = arith.cmpi slt, %6, %66 : vector<1x512xi32>
    %68 = arith.andi %65, %67 : vector<1x512xi1>
    %c1_i32_18 = arith.constant 1 : i32
    %69 = vector.broadcast %c1_i32_18 : i32 to vector<1x512xi32>
    %70 = arith.cmpi sge, %2, %69 : vector<1x512xi32>
    %71 = arith.andi %68, %70 : vector<1x512xi1>
    %c17_i32_19 = arith.constant 17 : i32
    %72 = vector.broadcast %c17_i32_19 : i32 to vector<1x512xi32>
    %73 = arith.cmpi slt, %2, %72 : vector<1x512xi32>
    %74 = arith.andi %71, %73 : vector<1x512xi1>
    %c-1_i32_20 = arith.constant -1 : i32
    %75 = vector.broadcast %c-1_i32_20 : i32 to vector<1x512xi32>
    %76 = arith.cmpi sge, %6, %75 : vector<1x512xi32>
    %c15_i32_21 = arith.constant 15 : i32
    %77 = vector.broadcast %c15_i32_21 : i32 to vector<1x512xi32>
    %78 = arith.cmpi slt, %6, %77 : vector<1x512xi32>
    %79 = arith.andi %76, %78 : vector<1x512xi1>
    %c0_i32_22 = arith.constant 0 : i32
    %80 = vector.broadcast %c0_i32_22 : i32 to vector<1x512xi32>
    %81 = arith.cmpi sge, %2, %80 : vector<1x512xi32>
    %82 = arith.andi %79, %81 : vector<1x512xi1>
    %c16_i32_23 = arith.constant 16 : i32
    %83 = vector.broadcast %c16_i32_23 : i32 to vector<1x512xi32>
    %84 = arith.cmpi slt, %2, %83 : vector<1x512xi32>
    %85 = arith.andi %82, %84 : vector<1x512xi1>
    %c-1_i32_24 = arith.constant -1 : i32
    %86 = vector.broadcast %c-1_i32_24 : i32 to vector<1x512xi32>
    %87 = arith.cmpi sge, %6, %86 : vector<1x512xi32>
    %c15_i32_25 = arith.constant 15 : i32
    %88 = vector.broadcast %c15_i32_25 : i32 to vector<1x512xi32>
    %89 = arith.cmpi slt, %6, %88 : vector<1x512xi32>
    %90 = arith.andi %87, %89 : vector<1x512xi1>
    %c-1_i32_26 = arith.constant -1 : i32
    %91 = vector.broadcast %c-1_i32_26 : i32 to vector<1x512xi32>
    %92 = arith.cmpi sge, %2, %91 : vector<1x512xi32>
    %93 = arith.andi %90, %92 : vector<1x512xi1>
    %c15_i32_27 = arith.constant 15 : i32
    %94 = vector.broadcast %c15_i32_27 : i32 to vector<1x512xi32>
    %95 = arith.cmpi slt, %2, %94 : vector<1x512xi32>
    %96 = arith.andi %93, %95 : vector<1x512xi1>
    %cst = arith.constant 0.000000e+00 : f32
    %97 = vector.broadcast %cst : f32 to vector<1x512xf32>
    %cst_28 = arith.constant 0.000000e+00 : f32
    %98 = vector.broadcast %cst_28 : f32 to vector<1x512xf32>
    %c0_i32_29 = arith.constant 0 : i32
    %99 = vector.broadcast %c0_i32_29 : i32 to vector<1x512xi32>
    %c0_i32_30 = arith.constant 0 : i32
    %100 = vector.broadcast %c0_i32_30 : i32 to vector<1x512xi32>
    %101 = arith.cmpi eq, %8, %100 : vector<1x512xi32>
    %c0 = arith.constant 0 : index
    %102 = memref.load %arg1[%c0] : memref<2xi32, #tpu.memory_space<smem>>
    %103 = arith.index_cast %102 : i32 to index
    %104 = memref.load %arg2[%103] : memref<16xf32, #tpu.memory_space<smem>>
    %105 = vector.broadcast %104 : f32 to vector<1x512xf32>
    %106 = arith.select %101, %105, %97 : vector<1x512xi1>, vector<1x512xf32>
    %c0_31 = arith.constant 0 : index
    %107 = memref.load %arg1[%c0_31] : memref<2xi32, #tpu.memory_space<smem>>
    %108 = arith.index_cast %107 : i32 to index
    %109 = memref.load %arg3[%108] : memref<16xf32, #tpu.memory_space<smem>>
    %110 = vector.broadcast %109 : f32 to vector<1x512xf32>
    %111 = arith.select %101, %110, %98 : vector<1x512xi1>, vector<1x512xf32>
    %c0_32 = arith.constant 0 : index
    %112 = memref.load %arg1[%c0_32] : memref<2xi32, #tpu.memory_space<smem>>
    %113 = vector.broadcast %112 : i32 to vector<1x512xi32>
    %114 = arith.select %101, %113, %99 : vector<1x512xi1>, vector<1x512xi32>
    %c1_i32_33 = arith.constant 1 : i32
    %115 = vector.broadcast %c1_i32_33 : i32 to vector<1x512xi32>
    %116 = arith.cmpi eq, %8, %115 : vector<1x512xi32>
    %c1 = arith.constant 1 : index
    %117 = memref.load %arg1[%c1] : memref<2xi32, #tpu.memory_space<smem>>
    %118 = arith.index_cast %117 : i32 to index
    %119 = memref.load %arg2[%118] : memref<16xf32, #tpu.memory_space<smem>>
    %120 = vector.broadcast %119 : f32 to vector<1x512xf32>
    %121 = arith.select %116, %120, %106 : vector<1x512xi1>, vector<1x512xf32>
    %c1_34 = arith.constant 1 : index
    %122 = memref.load %arg1[%c1_34] : memref<2xi32, #tpu.memory_space<smem>>
    %123 = arith.index_cast %122 : i32 to index
    %124 = memref.load %arg3[%123] : memref<16xf32, #tpu.memory_space<smem>>
    %125 = vector.broadcast %124 : f32 to vector<1x512xf32>
    %126 = arith.select %116, %125, %111 : vector<1x512xi1>, vector<1x512xf32>
    %c1_35 = arith.constant 1 : index
    %127 = memref.load %arg1[%c1_35] : memref<2xi32, #tpu.memory_space<smem>>
    %128 = vector.broadcast %127 : i32 to vector<1x512xi32>
    %129 = arith.select %116, %128, %114 : vector<1x512xi1>, vector<1x512xi32>
    %130 = tpu.iota {dimensions = array<i32: 0>} : vector<16x1xi32>
    %131 = vector.broadcast %130 : vector<16x1xi32> to vector<16x512xi32>
    %132 = vector.broadcast %129 : vector<1x512xi32> to vector<16x512xi32>
    %133 = arith.cmpi eq, %131, %132 : vector<16x512xi32>
    %134 = arith.extui %133 : vector<16x512xi1> to vector<16x512xi32>
    %135 = arith.sitofp %134 : vector<16x512xi32> to vector<16x512xf32>
    %c0_36 = arith.constant 0 : index
    %c0_37 = arith.constant 0 : index
    %136 = vector.load %arg10[%c0_36, %c0_37] : memref<16x16xf32, #tpu.memory_space<vmem>>, vector<16x16xf32>
    %cst_38 = arith.constant dense<0.000000e+00> : vector<16x512xf32>
    %137 = tpu.matmul %136, %135, %cst_38 {dimension_numbers = #tpu.dot_dimension_numbers<[1], [0], [0], [1], [0, 0, 1, 1], [], []>, precision = #tpu.contract_precision<fp32>} : vector<16x16xf32>, vector<16x512xf32>, vector<16x512xf32> -> vector<16x512xf32>
    %c0_39 = arith.constant 0 : index
    %c0_40 = arith.constant 0 : index
    %c0_41 = arith.constant 0 : index
    %138 = vector.load %arg4[%c0_39, %c0_40, %c0_41] : memref<2x4x256xf32, #tpu.memory_space<vmem>>, vector<1x4x256xf32>
    %139 = vector.shape_cast %138 : vector<1x4x256xf32> to vector<4x256xf32>
    %c1_42 = arith.constant 1 : index
    %c0_43 = arith.constant 0 : index
    %c0_44 = arith.constant 0 : index
    %140 = vector.load %arg4[%c1_42, %c0_43, %c0_44] : memref<2x4x256xf32, #tpu.memory_space<vmem>>, vector<1x4x256xf32>
    %141 = vector.shape_cast %140 : vector<1x4x256xf32> to vector<4x256xf32>
    %142 = tpu.concatenate %139, %141 in 1 : vector<4x256xf32>, vector<4x256xf32> -> vector<4x512xf32>
    %c0_45 = arith.constant 0 : index
    %c0_46 = arith.constant 0 : index
    %c0_47 = arith.constant 0 : index
    %143 = vector.load %arg5[%c0_45, %c0_46, %c0_47] : memref<2x4x256xf32, #tpu.memory_space<vmem>>, vector<1x4x256xf32>
    %144 = vector.shape_cast %143 : vector<1x4x256xf32> to vector<4x256xf32>
    %c1_48 = arith.constant 1 : index
    %c0_49 = arith.constant 0 : index
    %c0_50 = arith.constant 0 : index
    %145 = vector.load %arg5[%c1_48, %c0_49, %c0_50] : memref<2x4x256xf32, #tpu.memory_space<vmem>>, vector<1x4x256xf32>
    %146 = vector.shape_cast %145 : vector<1x4x256xf32> to vector<4x256xf32>
    %147 = tpu.concatenate %144, %146 in 1 : vector<4x256xf32>, vector<4x256xf32> -> vector<4x512xf32>
    %148 = vector.broadcast %121 : vector<1x512xf32> to vector<4x512xf32>
    %149 = arith.mulf %148, %142 : vector<4x512xf32>
    %150 = vector.broadcast %126 : vector<1x512xf32> to vector<4x512xf32>
    %151 = arith.mulf %150, %147 : vector<4x512xf32>
    %152 = arith.addf %149, %151 : vector<4x512xf32>
    %153 = vector.extract_strided_slice %152 {offsets = [0, 495], sizes = [4, 17], strides = [1, 1]} : vector<4x512xf32> to vector<4x17xf32>
    %154 = vector.extract_strided_slice %152 {offsets = [0, 0], sizes = [4, 495], strides = [1, 1]} : vector<4x512xf32> to vector<4x495xf32>
    %155 = tpu.concatenate %153, %154 in 1 : vector<4x17xf32>, vector<4x495xf32> -> vector<4x512xf32>
    %cst_51 = arith.constant 0.000000e+00 : f32
    %156 = vector.shape_cast %19 : vector<1x512xi1> to vector<1x512xi1>
    %157 = vector.broadcast %156 : vector<1x512xi1> to vector<4x512xi1>
    %158 = vector.broadcast %cst_51 : f32 to vector<4x512xf32>
    %159 = arith.select %157, %155, %158 : vector<4x512xi1>, vector<4x512xf32>
    %c0_52 = arith.constant 0 : index
    %c0_53 = arith.constant 0 : index
    %160 = vector.load %arg12[%c0_52, %c0_53] : memref<36x512xf32, #tpu.memory_space<vmem>>, vector<4x512xf32>
    tpu.vector_store %arg12[%c0_52, %c0_53], %159 {strides = array<i32>} : memref<36x512xf32, #tpu.memory_space<vmem>>, vector<4x512xf32>,
    %161 = vector.extract_strided_slice %152 {offsets = [0, 496], sizes = [4, 16], strides = [1, 1]} : vector<4x512xf32> to vector<4x16xf32>
    %162 = vector.extract_strided_slice %152 {offsets = [0, 0], sizes = [4, 496], strides = [1, 1]} : vector<4x512xf32> to vector<4x496xf32>
    %163 = tpu.concatenate %161, %162 in 1 : vector<4x16xf32>, vector<4x496xf32> -> vector<4x512xf32>
    %cst_54 = arith.constant 0.000000e+00 : f32
    %164 = vector.shape_cast %30 : vector<1x512xi1> to vector<1x512xi1>
    %165 = vector.broadcast %164 : vector<1x512xi1> to vector<4x512xi1>
    %166 = vector.broadcast %cst_54 : f32 to vector<4x512xf32>
    %167 = arith.select %165, %163, %166 : vector<4x512xi1>, vector<4x512xf32>
    %c4 = arith.constant 4 : index
    %c0_55 = arith.constant 0 : index
    %168 = vector.load %arg12[%c4, %c0_55] : memref<36x512xf32, #tpu.memory_space<vmem>>, vector<4x512xf32>
    tpu.vector_store %arg12[%c4, %c0_55], %167 {strides = array<i32>} : memref<36x512xf32, #tpu.memory_space<vmem>>, vector<4x512xf32>,
    %169 = vector.extract_strided_slice %152 {offsets = [0, 497], sizes = [4, 15], strides = [1, 1]} : vector<4x512xf32> to vector<4x15xf32>
    %170 = vector.extract_strided_slice %152 {offsets = [0, 0], sizes = [4, 497], strides = [1, 1]} : vector<4x512xf32> to vector<4x497xf32>
    %171 = tpu.concatenate %169, %170 in 1 : vector<4x15xf32>, vector<4x497xf32> -> vector<4x512xf32>
    %cst_56 = arith.constant 0.000000e+00 : f32
    %172 = vector.shape_cast %41 : vector<1x512xi1> to vector<1x512xi1>
    %173 = vector.broadcast %172 : vector<1x512xi1> to vector<4x512xi1>
    %174 = vector.broadcast %cst_56 : f32 to vector<4x512xf32>
    %175 = arith.select %173, %171, %174 : vector<4x512xi1>, vector<4x512xf32>
    %c8 = arith.constant 8 : index
    %c0_57 = arith.constant 0 : index
    %176 = vector.load %arg12[%c8, %c0_57] : memref<36x512xf32, #tpu.memory_space<vmem>>, vector<4x512xf32>
    tpu.vector_store %arg12[%c8, %c0_57], %175 {strides = array<i32>} : memref<36x512xf32, #tpu.memory_space<vmem>>, vector<4x512xf32>,
    %177 = vector.extract_strided_slice %152 {offsets = [0, 511], sizes = [4, 1], strides = [1, 1]} : vector<4x512xf32> to vector<4x1xf32>
    %178 = vector.extract_strided_slice %152 {offsets = [0, 0], sizes = [4, 511], strides = [1, 1]} : vector<4x512xf32> to vector<4x511xf32>
    %179 = tpu.concatenate %177, %178 in 1 : vector<4x1xf32>, vector<4x511xf32> -> vector<4x512xf32>
    %cst_58 = arith.constant 0.000000e+00 : f32
    %180 = vector.shape_cast %52 : vector<1x512xi1> to vector<1x512xi1>
    %181 = vector.broadcast %180 : vector<1x512xi1> to vector<4x512xi1>
    %182 = vector.broadcast %cst_58 : f32 to vector<4x512xf32>
    %183 = arith.select %181, %179, %182 : vector<4x512xi1>, vector<4x512xf32>
    %c12 = arith.constant 12 : index
    %c0_59 = arith.constant 0 : index
    %184 = vector.load %arg12[%c12, %c0_59] : memref<36x512xf32, #tpu.memory_space<vmem>>, vector<4x512xf32>
    tpu.vector_store %arg12[%c12, %c0_59], %183 {strides = array<i32>} : memref<36x512xf32, #tpu.memory_space<vmem>>, vector<4x512xf32>,
    %c16 = arith.constant 16 : index
    %c0_60 = arith.constant 0 : index
    %185 = vector.load %arg12[%c16, %c0_60] : memref<36x512xf32, #tpu.memory_space<vmem>>, vector<4x512xf32>
    tpu.vector_store %arg12[%c16, %c0_60], %152 {strides = array<i32>} : memref<36x512xf32, #tpu.memory_space<vmem>>, vector<4x512xf32>,
    %186 = vector.extract_strided_slice %152 {offsets = [0, 1], sizes = [4, 511], strides = [1, 1]} : vector<4x512xf32> to vector<4x511xf32>
    %187 = vector.extract_strided_slice %152 {offsets = [0, 0], sizes = [4, 1], strides = [1, 1]} : vector<4x512xf32> to vector<4x1xf32>
    %188 = tpu.concatenate %186, %187 in 1 : vector<4x511xf32>, vector<4x1xf32> -> vector<4x512xf32>
    %cst_61 = arith.constant 0.000000e+00 : f32
    %189 = vector.shape_cast %63 : vector<1x512xi1> to vector<1x512xi1>
    %190 = vector.broadcast %189 : vector<1x512xi1> to vector<4x512xi1>
    %191 = vector.broadcast %cst_61 : f32 to vector<4x512xf32>
    %192 = arith.select %190, %188, %191 : vector<4x512xi1>, vector<4x512xf32>
    %c20 = arith.constant 20 : index
    %c0_62 = arith.constant 0 : index
    %193 = vector.load %arg12[%c20, %c0_62] : memref<36x512xf32, #tpu.memory_space<vmem>>, vector<4x512xf32>
    tpu.vector_store %arg12[%c20, %c0_62], %192 {strides = array<i32>} : memref<36x512xf32, #tpu.memory_space<vmem>>, vector<4x512xf32>,
    %194 = vector.extract_strided_slice %152 {offsets = [0, 15], sizes = [4, 497], strides = [1, 1]} : vector<4x512xf32> to vector<4x497xf32>
    %195 = vector.extract_strided_slice %152 {offsets = [0, 0], sizes = [4, 15], strides = [1, 1]} : vector<4x512xf32> to vector<4x15xf32>
    %196 = tpu.concatenate %194, %195 in 1 : vector<4x497xf32>, vector<4x15xf32> -> vector<4x512xf32>
    %cst_63 = arith.constant 0.000000e+00 : f32
    %197 = vector.shape_cast %74 : vector<1x512xi1> to vector<1x512xi1>
    %198 = vector.broadcast %197 : vector<1x512xi1> to vector<4x512xi1>
    %199 = vector.broadcast %cst_63 : f32 to vector<4x512xf32>
    %200 = arith.select %198, %196, %199 : vector<4x512xi1>, vector<4x512xf32>
    %c24 = arith.constant 24 : index
    %c0_64 = arith.constant 0 : index
    %201 = vector.load %arg12[%c24, %c0_64] : memref<36x512xf32, #tpu.memory_space<vmem>>, vector<4x512xf32>
    tpu.vector_store %arg12[%c24, %c0_64], %200 {strides = array<i32>} : memref<36x512xf32, #tpu.memory_space<vmem>>, vector<4x512xf32>,
    %202 = vector.extract_strided_slice %152 {offsets = [0, 16], sizes = [4, 496], strides = [1, 1]} : vector<4x512xf32> to vector<4x496xf32>
    %203 = vector.extract_strided_slice %152 {offsets = [0, 0], sizes = [4, 16], strides = [1, 1]} : vector<4x512xf32> to vector<4x16xf32>
    %204 = tpu.concatenate %202, %203 in 1 : vector<4x496xf32>, vector<4x16xf32> -> vector<4x512xf32>
    %cst_65 = arith.constant 0.000000e+00 : f32
    %205 = vector.shape_cast %85 : vector<1x512xi1> to vector<1x512xi1>
    %206 = vector.broadcast %205 : vector<1x512xi1> to vector<4x512xi1>
    %207 = vector.broadcast %cst_65 : f32 to vector<4x512xf32>
    %208 = arith.select %206, %204, %207 : vector<4x512xi1>, vector<4x512xf32>
    %c28 = arith.constant 28 : index
    %c0_66 = arith.constant 0 : index
    %209 = vector.load %arg12[%c28, %c0_66] : memref<36x512xf32, #tpu.memory_space<vmem>>, vector<4x512xf32>
    tpu.vector_store %arg12[%c28, %c0_66], %208 {strides = array<i32>} : memref<36x512xf32, #tpu.memory_space<vmem>>, vector<4x512xf32>,
    %210 = vector.extract_strided_slice %152 {offsets = [0, 17], sizes = [4, 495], strides = [1, 1]} : vector<4x512xf32> to vector<4x495xf32>
    %211 = vector.extract_strided_slice %152 {offsets = [0, 0], sizes = [4, 17], strides = [1, 1]} : vector<4x512xf32> to vector<4x17xf32>
    %212 = tpu.concatenate %210, %211 in 1 : vector<4x495xf32>, vector<4x17xf32> -> vector<4x512xf32>
    %cst_67 = arith.constant 0.000000e+00 : f32
    %213 = vector.shape_cast %96 : vector<1x512xi1> to vector<1x512xi1>
    %214 = vector.broadcast %213 : vector<1x512xi1> to vector<4x512xi1>
    %215 = vector.broadcast %cst_67 : f32 to vector<4x512xf32>
    %216 = arith.select %214, %212, %215 : vector<4x512xi1>, vector<4x512xf32>
    %c32 = arith.constant 32 : index
    %c0_68 = arith.constant 0 : index
    %217 = vector.load %arg12[%c32, %c0_68] : memref<36x512xf32, #tpu.memory_space<vmem>>, vector<4x512xf32>
    tpu.vector_store %arg12[%c32, %c0_68], %216 {strides = array<i32>} : memref<36x512xf32, #tpu.memory_space<vmem>>, vector<4x512xf32>,
    %c0_69 = arith.constant 0 : index
    %c0_70 = arith.constant 0 : index
    %218 = vector.load %arg6[%c0_69, %c0_70] : memref<16x36xf32, #tpu.memory_space<vmem>>, vector<16x36xf32>
    %c0_71 = arith.constant 0 : index
    %c0_72 = arith.constant 0 : index
    %219 = vector.load %arg12[%c0_71, %c0_72] : memref<36x512xf32, #tpu.memory_space<vmem>>, vector<36x512xf32>
    %cst_73 = arith.constant dense<0.000000e+00> : vector<16x512xf32>
    %220 = tpu.matmul %218, %219, %cst_73 {dimension_numbers = #tpu.dot_dimension_numbers<[1], [0], [0], [1], [0, 0, 1, 1], [], []>} : vector<16x36xf32>, vector<36x512xf32>, vector<16x512xf32> -> vector<16x512xf32>
    %c0_74 = arith.constant 0 : index
    %c0_75 = arith.constant 0 : index
    %221 = vector.load %arg7[%c0_74, %c0_75] : memref<16x1xf32, #tpu.memory_space<vmem>>, vector<16x1xf32>
    %222 = vector.broadcast %221 : vector<16x1xf32> to vector<16x512xf32>
    %223 = arith.addf %220, %222 : vector<16x512xf32>
    %224 = arith.addf %223, %137 : vector<16x512xf32>
    %225 = arith.negf %224 : vector<16x512xf32>
    %226 = math.exp %225 : vector<16x512xf32>
    %cst_76 = arith.constant 1.000000e+00 : f32
    %227 = vector.broadcast %cst_76 : f32 to vector<16x512xf32>
    %228 = arith.addf %227, %226 : vector<16x512xf32>
    %229 = arith.divf %227, %228 : vector<16x512xf32>
    %230 = arith.mulf %224, %229 : vector<16x512xf32>
    %231 = vector.extract_strided_slice %230 {offsets = [0, 495], sizes = [16, 17], strides = [1, 1]} : vector<16x512xf32> to vector<16x17xf32>
    %232 = vector.extract_strided_slice %230 {offsets = [0, 0], sizes = [16, 495], strides = [1, 1]} : vector<16x512xf32> to vector<16x495xf32>
    %233 = tpu.concatenate %231, %232 in 1 : vector<16x17xf32>, vector<16x495xf32> -> vector<16x512xf32>
    %cst_77 = arith.constant 0.000000e+00 : f32
    %234 = vector.shape_cast %19 : vector<1x512xi1> to vector<1x512xi1>
    %235 = vector.broadcast %234 : vector<1x512xi1> to vector<16x512xi1>
    %236 = vector.broadcast %cst_77 : f32 to vector<16x512xf32>
    %237 = arith.select %235, %233, %236 : vector<16x512xi1>, vector<16x512xf32>
    %c0_78 = arith.constant 0 : index
    %c0_79 = arith.constant 0 : index
    %238 = vector.load %arg13[%c0_78, %c0_79] : memref<144x512xf32, #tpu.memory_space<vmem>>, vector<16x512xf32>
    tpu.vector_store %arg13[%c0_78, %c0_79], %237 {strides = array<i32>} : memref<144x512xf32, #tpu.memory_space<vmem>>, vector<16x512xf32>,
    %239 = vector.extract_strided_slice %230 {offsets = [0, 496], sizes = [16, 16], strides = [1, 1]} : vector<16x512xf32> to vector<16x16xf32>
    %240 = vector.extract_strided_slice %230 {offsets = [0, 0], sizes = [16, 496], strides = [1, 1]} : vector<16x512xf32> to vector<16x496xf32>
    %241 = tpu.concatenate %239, %240 in 1 : vector<16x16xf32>, vector<16x496xf32> -> vector<16x512xf32>
    %cst_80 = arith.constant 0.000000e+00 : f32
    %242 = vector.shape_cast %30 : vector<1x512xi1> to vector<1x512xi1>
    %243 = vector.broadcast %242 : vector<1x512xi1> to vector<16x512xi1>
    %244 = vector.broadcast %cst_80 : f32 to vector<16x512xf32>
    %245 = arith.select %243, %241, %244 : vector<16x512xi1>, vector<16x512xf32>
    %c16_81 = arith.constant 16 : index
    %c0_82 = arith.constant 0 : index
    %246 = vector.load %arg13[%c16_81, %c0_82] : memref<144x512xf32, #tpu.memory_space<vmem>>, vector<16x512xf32>
    tpu.vector_store %arg13[%c16_81, %c0_82], %245 {strides = array<i32>} : memref<144x512xf32, #tpu.memory_space<vmem>>, vector<16x512xf32>,
    %247 = vector.extract_strided_slice %230 {offsets = [0, 497], sizes = [16, 15], strides = [1, 1]} : vector<16x512xf32> to vector<16x15xf32>
    %248 = vector.extract_strided_slice %230 {offsets = [0, 0], sizes = [16, 497], strides = [1, 1]} : vector<16x512xf32> to vector<16x497xf32>
    %249 = tpu.concatenate %247, %248 in 1 : vector<16x15xf32>, vector<16x497xf32> -> vector<16x512xf32>
    %cst_83 = arith.constant 0.000000e+00 : f32
    %250 = vector.shape_cast %41 : vector<1x512xi1> to vector<1x512xi1>
    %251 = vector.broadcast %250 : vector<1x512xi1> to vector<16x512xi1>
    %252 = vector.broadcast %cst_83 : f32 to vector<16x512xf32>
    %253 = arith.select %251, %249, %252 : vector<16x512xi1>, vector<16x512xf32>
    %c32_84 = arith.constant 32 : index
    %c0_85 = arith.constant 0 : index
    %254 = vector.load %arg13[%c32_84, %c0_85] : memref<144x512xf32, #tpu.memory_space<vmem>>, vector<16x512xf32>
    tpu.vector_store %arg13[%c32_84, %c0_85], %253 {strides = array<i32>} : memref<144x512xf32, #tpu.memory_space<vmem>>, vector<16x512xf32>,
    %255 = vector.extract_strided_slice %230 {offsets = [0, 511], sizes = [16, 1], strides = [1, 1]} : vector<16x512xf32> to vector<16x1xf32>
    %256 = vector.extract_strided_slice %230 {offsets = [0, 0], sizes = [16, 511], strides = [1, 1]} : vector<16x512xf32> to vector<16x511xf32>
    %257 = tpu.concatenate %255, %256 in 1 : vector<16x1xf32>, vector<16x511xf32> -> vector<16x512xf32>
    %cst_86 = arith.constant 0.000000e+00 : f32
    %258 = vector.shape_cast %52 : vector<1x512xi1> to vector<1x512xi1>
    %259 = vector.broadcast %258 : vector<1x512xi1> to vector<16x512xi1>
    %260 = vector.broadcast %cst_86 : f32 to vector<16x512xf32>
    %261 = arith.select %259, %257, %260 : vector<16x512xi1>, vector<16x512xf32>
    %c48 = arith.constant 48 : index
    %c0_87 = arith.constant 0 : index
    %262 = vector.load %arg13[%c48, %c0_87] : memref<144x512xf32, #tpu.memory_space<vmem>>, vector<16x512xf32>
    tpu.vector_store %arg13[%c48, %c0_87], %261 {strides = array<i32>} : memref<144x512xf32, #tpu.memory_space<vmem>>, vector<16x512xf32>,
    %c64 = arith.constant 64 : index
    %c0_88 = arith.constant 0 : index
    %263 = vector.load %arg13[%c64, %c0_88] : memref<144x512xf32, #tpu.memory_space<vmem>>, vector<16x512xf32>
    tpu.vector_store %arg13[%c64, %c0_88], %230 {strides = array<i32>} : memref<144x512xf32, #tpu.memory_space<vmem>>, vector<16x512xf32>,
    %264 = vector.extract_strided_slice %230 {offsets = [0, 1], sizes = [16, 511], strides = [1, 1]} : vector<16x512xf32> to vector<16x511xf32>
    %265 = vector.extract_strided_slice %230 {offsets = [0, 0], sizes = [16, 1], strides = [1, 1]} : vector<16x512xf32> to vector<16x1xf32>
    %266 = tpu.concatenate %264, %265 in 1 : vector<16x511xf32>, vector<16x1xf32> -> vector<16x512xf32>
    %cst_89 = arith.constant 0.000000e+00 : f32
    %267 = vector.shape_cast %63 : vector<1x512xi1> to vector<1x512xi1>
    %268 = vector.broadcast %267 : vector<1x512xi1> to vector<16x512xi1>
    %269 = vector.broadcast %cst_89 : f32 to vector<16x512xf32>
    %270 = arith.select %268, %266, %269 : vector<16x512xi1>, vector<16x512xf32>
    %c80 = arith.constant 80 : index
    %c0_90 = arith.constant 0 : index
    %271 = vector.load %arg13[%c80, %c0_90] : memref<144x512xf32, #tpu.memory_space<vmem>>, vector<16x512xf32>
    tpu.vector_store %arg13[%c80, %c0_90], %270 {strides = array<i32>} : memref<144x512xf32, #tpu.memory_space<vmem>>, vector<16x512xf32>,
    %272 = vector.extract_strided_slice %230 {offsets = [0, 15], sizes = [16, 497], strides = [1, 1]} : vector<16x512xf32> to vector<16x497xf32>
    %273 = vector.extract_strided_slice %230 {offsets = [0, 0], sizes = [16, 15], strides = [1, 1]} : vector<16x512xf32> to vector<16x15xf32>
    %274 = tpu.concatenate %272, %273 in 1 : vector<16x497xf32>, vector<16x15xf32> -> vector<16x512xf32>
    %cst_91 = arith.constant 0.000000e+00 : f32
    %275 = vector.shape_cast %74 : vector<1x512xi1> to vector<1x512xi1>
    %276 = vector.broadcast %275 : vector<1x512xi1> to vector<16x512xi1>
    %277 = vector.broadcast %cst_91 : f32 to vector<16x512xf32>
    %278 = arith.select %276, %274, %277 : vector<16x512xi1>, vector<16x512xf32>
    %c96 = arith.constant 96 : index
    %c0_92 = arith.constant 0 : index
    %279 = vector.load %arg13[%c96, %c0_92] : memref<144x512xf32, #tpu.memory_space<vmem>>, vector<16x512xf32>
    tpu.vector_store %arg13[%c96, %c0_92], %278 {strides = array<i32>} : memref<144x512xf32, #tpu.memory_space<vmem>>, vector<16x512xf32>,
    %280 = vector.extract_strided_slice %230 {offsets = [0, 16], sizes = [16, 496], strides = [1, 1]} : vector<16x512xf32> to vector<16x496xf32>
    %281 = vector.extract_strided_slice %230 {offsets = [0, 0], sizes = [16, 16], strides = [1, 1]} : vector<16x512xf32> to vector<16x16xf32>
    %282 = tpu.concatenate %280, %281 in 1 : vector<16x496xf32>, vector<16x16xf32> -> vector<16x512xf32>
    %cst_93 = arith.constant 0.000000e+00 : f32
    %283 = vector.shape_cast %85 : vector<1x512xi1> to vector<1x512xi1>
    %284 = vector.broadcast %283 : vector<1x512xi1> to vector<16x512xi1>
    %285 = vector.broadcast %cst_93 : f32 to vector<16x512xf32>
    %286 = arith.select %284, %282, %285 : vector<16x512xi1>, vector<16x512xf32>
    %c112 = arith.constant 112 : index
    %c0_94 = arith.constant 0 : index
    %287 = vector.load %arg13[%c112, %c0_94] : memref<144x512xf32, #tpu.memory_space<vmem>>, vector<16x512xf32>
    tpu.vector_store %arg13[%c112, %c0_94], %286 {strides = array<i32>} : memref<144x512xf32, #tpu.memory_space<vmem>>, vector<16x512xf32>,
    %288 = vector.extract_strided_slice %230 {offsets = [0, 17], sizes = [16, 495], strides = [1, 1]} : vector<16x512xf32> to vector<16x495xf32>
    %289 = vector.extract_strided_slice %230 {offsets = [0, 0], sizes = [16, 17], strides = [1, 1]} : vector<16x512xf32> to vector<16x17xf32>
    %290 = tpu.concatenate %288, %289 in 1 : vector<16x495xf32>, vector<16x17xf32> -> vector<16x512xf32>
    %cst_95 = arith.constant 0.000000e+00 : f32
    %291 = vector.shape_cast %96 : vector<1x512xi1> to vector<1x512xi1>
    %292 = vector.broadcast %291 : vector<1x512xi1> to vector<16x512xi1>
    %293 = vector.broadcast %cst_95 : f32 to vector<16x512xf32>
    %294 = arith.select %292, %290, %293 : vector<16x512xi1>, vector<16x512xf32>
    %c128 = arith.constant 128 : index
    %c0_96 = arith.constant 0 : index
    %295 = vector.load %arg13[%c128, %c0_96] : memref<144x512xf32, #tpu.memory_space<vmem>>, vector<16x512xf32>
    tpu.vector_store %arg13[%c128, %c0_96], %294 {strides = array<i32>} : memref<144x512xf32, #tpu.memory_space<vmem>>, vector<16x512xf32>,
    %c0_97 = arith.constant 0 : index
    %c0_98 = arith.constant 0 : index
    %296 = vector.load %arg8[%c0_97, %c0_98] : memref<4x144xf32, #tpu.memory_space<vmem>>, vector<4x144xf32>
    %c0_99 = arith.constant 0 : index
    %c0_100 = arith.constant 0 : index
    %297 = vector.load %arg13[%c0_99, %c0_100] : memref<144x512xf32, #tpu.memory_space<vmem>>, vector<144x512xf32>
    %cst_101 = arith.constant dense<0.000000e+00> : vector<4x512xf32>
    %298 = tpu.matmul %296, %297, %cst_101 {dimension_numbers = #tpu.dot_dimension_numbers<[1], [0], [0], [1], [0, 0, 1, 1], [], []>} : vector<4x144xf32>, vector<144x512xf32>, vector<4x512xf32> -> vector<4x512xf32>
    %c0_102 = arith.constant 0 : index
    %c0_103 = arith.constant 0 : index
    %299 = vector.load %arg9[%c0_102, %c0_103] : memref<4x1xf32, #tpu.memory_space<vmem>>, vector<4x1xf32>
    %300 = vector.broadcast %299 : vector<4x1xf32> to vector<4x512xf32>
    %301 = arith.addf %298, %300 : vector<4x512xf32>
    %302 = arith.subf %147, %301 : vector<4x512xf32>
    %303 = arith.mulf %302, %302 : vector<4x512xf32>
    %304 = vector.shape_cast %303 : vector<4x512xf32> to vector<1x4x512xf32>
    %cst_104 = arith.constant dense<0.000000e+00> : vector<1xf32>
    %305 = vector.multi_reduction <add>, %304, %cst_104 [1, 2] : vector<1x4x512xf32> to vector<1xf32>
    %306 = vector.shape_cast %305 : vector<1xf32> to vector<1x1x1xf32>
    %307 = vector.extract %306[0, 0, 0] : f32 from vector<1x1x1xf32>
    %cst_105 = arith.constant 4.8828125E-4 : f32
    %308 = arith.mulf %307, %cst_105 : f32
    %309 = vector.broadcast %308 : f32 to vector<1x1xf32>
    %c0_106 = arith.constant 0 : index
    %c0_107 = arith.constant 0 : index
    %310 = vector.load %arg11[%c0_106, %c0_107] : memref<1x1xf32, #tpu.memory_space<vmem>>, vector<1x1xf32>
    tpu.vector_store %arg11[%c0_106, %c0_107], %309 {strides = array<i32>} : memref<1x1xf32, #tpu.memory_space<vmem>>, vector<1x1xf32>,
    return
  }
  func.func @transform_0(%arg0: i32) -> i32 {
    %c0_i32 = arith.constant 0 : i32
    %c0_i32_0 = arith.constant 0 : i32
    return %c0_i32 : i32
  }
  func.func @transform_1(%arg0: i32) -> i32 {
    %c0_i32 = arith.constant 0 : i32
    %c0_i32_0 = arith.constant 0 : i32
    return %c0_i32 : i32
  }
  func.func @transform_2(%arg0: i32) -> i32 {
    %c0_i32 = arith.constant 0 : i32
    %c0_i32_0 = arith.constant 0 : i32
    return %c0_i32 : i32
  }
  func.func @transform_3(%arg0: i32) -> (i32, i32, i32) {
    %c0_i32 = arith.constant 0 : i32
    %c0_i32_0 = arith.constant 0 : i32
    %c0_i32_1 = arith.constant 0 : i32
    %c0_i32_2 = arith.constant 0 : i32
    return %c0_i32, %c0_i32_0, %c0_i32_1 : i32, i32, i32
  }
  func.func @transform_4(%arg0: i32) -> (i32, i32, i32) {
    %c0_i32 = arith.constant 0 : i32
    %c0_i32_0 = arith.constant 0 : i32
    %c0_i32_1 = arith.constant 0 : i32
    %c0_i32_2 = arith.constant 0 : i32
    return %c0_i32, %c0_i32_0, %c0_i32_1 : i32, i32, i32
  }
  func.func @transform_5(%arg0: i32) -> (i32, i32) {
    %c0_i32 = arith.constant 0 : i32
    %c0_i32_0 = arith.constant 0 : i32
    %c0_i32_1 = arith.constant 0 : i32
    return %c0_i32, %c0_i32_0 : i32, i32
  }
  func.func @transform_6(%arg0: i32) -> (i32, i32) {
    %c0_i32 = arith.constant 0 : i32
    %c0_i32_0 = arith.constant 0 : i32
    %c0_i32_1 = arith.constant 0 : i32
    return %c0_i32, %c0_i32_0 : i32, i32
  }
  func.func @transform_7(%arg0: i32) -> (i32, i32) {
    %c0_i32 = arith.constant 0 : i32
    %c0_i32_0 = arith.constant 0 : i32
    %c0_i32_1 = arith.constant 0 : i32
    return %c0_i32, %c0_i32_0 : i32, i32
  }
  func.func @transform_8(%arg0: i32) -> (i32, i32) {
    %c0_i32 = arith.constant 0 : i32
    %c0_i32_0 = arith.constant 0 : i32
    %c0_i32_1 = arith.constant 0 : i32
    return %c0_i32, %c0_i32_0 : i32, i32
  }
  func.func @transform_9(%arg0: i32) -> (i32, i32) {
    %c0_i32 = arith.constant 0 : i32
    %c0_i32_0 = arith.constant 0 : i32
    %c0_i32_1 = arith.constant 0 : i32
    return %c0_i32, %c0_i32_0 : i32, i32
  }
  func.func @transform_10(%arg0: i32) -> (i32, i32) {
    %c0_i32 = arith.constant 0 : i32
    %c0_i32_0 = arith.constant 0 : i32
    %c0_i32_1 = arith.constant 0 : i32
    return %c0_i32, %c0_i32_0 : i32, i32
  }
}

</mosaic_0001>

<llo_original>
// kernel: diffusion_forward.17
$region0: #{diffusion_forward.17}
  #allocation0 [shape = 'u32[]', space=smem, size = 0x4, offset = 0x4, fixed_abs, tag = 'smem constant byte address 0x4 - core index']
  #allocation1 [shape = 'u32[72,128]{1,0:T(1,128)}', space=vmem, size = 0x9000, scoped, tag = 'internal scratch']
  #allocation2 [shape = 'f32[36,512]{1,0:T(8,128)}', space=vmem, size = 0x14000, scoped, tag = 'scratch operand']
  #allocation3 [shape = 'f32[144,512]{1,0:T(8,128)}', space=vmem, size = 0x48000, scoped, tag = 'scratch operand']
  %s0 = inlined_call_operand.vmem [shape: s32[2], index: 0, kind: input, shape index: {}]
  %s1 = inlined_call_operand.vmem [shape: f32[16], index: 1, kind: input, shape index: {}]
  %s2 = inlined_call_operand.vmem [shape: f32[16], index: 2, kind: input, shape index: {}]
  %s3 = inlined_call_operand.vmem [shape: f32[2,4,256], index: 3, kind: input, shape index: {}]
  %s4 = inlined_call_operand.vmem [shape: f32[2,4,256], index: 4, kind: input, shape index: {}]
  %s5 = inlined_call_operand.vmem [shape: f32[16,36], index: 5, kind: input, shape index: {}]
  %s6 = inlined_call_operand.vmem [shape: f32[16,1], index: 6, kind: input, shape index: {}]
  %s7 = inlined_call_operand.vmem [shape: f32[4,144], index: 7, kind: input, shape index: {}]
  %s8 = inlined_call_operand.vmem [shape: f32[4,1], index: 8, kind: input, shape index: {}]
  %s9 = inlined_call_operand.vmem [shape: f32[16,16], index: 9, kind: input, shape index: {}]
  %s10 = inlined_call_operand.hbm [shape: f32[1,1], index: 10, kind: output, shape index: {}]
  %s11 = sld [smem:[#allocation0]]
  $region62: #{diffusion_forward.17} parent=0
    _
  %s13 = ssub.s32 1, %s11
  %s14 = scalar_select 0, %s13, %s11
  $region1: #{diffusion_forward.17} parent=0
    #allocation4 [shape = 'u8[512]{0}', space=smem, size = 0x200, scoped, tag = 'input window, operand 0, single buffered']
    #allocation5 [shape = 's32[1]{0}', space=sflag, size = 0x4, scoped, tag = 'scoped memory for diffusion_forward.17']
    #allocation6 [shape = 's32[1]{0}', space=sflag, size = 0x4, scoped, tag = 'scoped memory for diffusion_forward.17']
    #allocation7 [shape = 'u8[512]{0}', space=smem, size = 0x200, scoped, tag = 'input window, operand 1, single buffered']
    #allocation8 [shape = 's32[1]{0}', space=sflag, size = 0x4, scoped, tag = 'scoped memory for diffusion_forward.17']
    #allocation9 [shape = 'u8[512]{0}', space=smem, size = 0x200, scoped, tag = 'input window, operand 2, single buffered']
    #allocation10 [shape = 'u8[512]{0}', space=vmem, size = 0x400, scoped, tag = 'output window, operand 0, single buffered']
    %15 = vsyncpa [#allocation6], 0
    %16 = vsyncpa [#allocation8], 0
    %17 = vsyncpa [#allocation5], 0
    // Predicated region
    $region2: #{diffusion_forward.17} parent=1 // pred_check
      _
    $region3: #{diffusion_forward.17} parent=1 // pred_check_branch
      %19 = sbr.rel (0) target = $region5
    $region4: #{diffusion_forward.17} parent=1 // pred_region
      %21 = vsyncadd [#allocation6], 0
      %s23 = sshll.u32 %s0, 4
      %s24 = int_to_ptr.vmem [resolvable:$true] %s23
      %26 = dma.vmem_to_smem %s24, 16, [#allocation4], [#allocation6]
    $region5: #{diffusion_forward.17} parent=1 // pred_fallthru
      _
    // Predicated region
    $region6: #{diffusion_forward.17} parent=1 // pred_check
      _
    $region7: #{diffusion_forward.17} parent=1 // pred_check_branch
      %28 = sbr.rel (0) target = $region9
    $region8: #{diffusion_forward.17} parent=1 // pred_region
      %30 = vsyncadd [#allocation8], 0
      %s32 = sshll.u32 %s1, 4
      %s33 = int_to_ptr.vmem [resolvable:$true] %s32
      %35 = dma.vmem_to_smem %s33, 16, [#allocation7], [#allocation8]
    $region9: #{diffusion_forward.17} parent=1 // pred_fallthru
      _
    // Predicated region
    $region10: #{diffusion_forward.17} parent=1 // pred_check
      _
    $region11: #{diffusion_forward.17} parent=1 // pred_check_branch
      %37 = sbr.rel (0) target = $region13
    $region12: #{diffusion_forward.17} parent=1 // pred_region
      %39 = vsyncadd [#allocation8], 0
      %s41 = sshll.u32 %s2, 4
      %s42 = int_to_ptr.vmem [resolvable:$true] %s41
      %44 = dma.vmem_to_smem %s42, 16, [#allocation9], [#allocation8]
    $region13: #{diffusion_forward.17} parent=1 // pred_fallthru
      _
    // Predicated region
    $region14: #{diffusion_forward.17} parent=1 // pred_check
      _
    $region15: #{diffusion_forward.17} parent=1 // pred_check_branch
      %46 = sbr.rel (0) target = $region17
    $region16: #{diffusion_forward.17} parent=1 // pred_region
      _
    $region17: #{diffusion_forward.17} parent=1 // pred_fallthru
      _
    // Predicated region
    $region18: #{diffusion_forward.17} parent=1 // pred_check
      _
    $region19: #{diffusion_forward.17} parent=1 // pred_check_branch
      %48 = sbr.rel (0) target = $region21
    $region20: #{diffusion_forward.17} parent=1 // pred_region
      _
    $region21: #{diffusion_forward.17} parent=1 // pred_fallthru
      _
    // Predicated region
    $region22: #{diffusion_forward.17} parent=1 // pred_check
      _
    $region23: #{diffusion_forward.17} parent=1 // pred_check_branch
      %50 = sbr.rel (0) target = $region25
    $region24: #{diffusion_forward.17} parent=1 // pred_region
      _
    $region25: #{diffusion_forward.17} parent=1 // pred_fallthru
      _
    // Predicated region
    $region26: #{diffusion_forward.17} parent=1 // pred_check
      _
    $region27: #{diffusion_forward.17} parent=1 // pred_check_branch
      %52 = sbr.rel (0) target = $region29
    $region28: #{diffusion_forward.17} parent=1 // pred_region
      _
    $region29: #{diffusion_forward.17} parent=1 // pred_fallthru
      _
    // Predicated region
    $region30: #{diffusion_forward.17} parent=1 // pred_check
      _
    $region31: #{diffusion_forward.17} parent=1 // pred_check_branch
      %54 = sbr.rel (0) target = $region33
    $region32: #{diffusion_forward.17} parent=1 // pred_region
      _
    $region33: #{diffusion_forward.17} parent=1 // pred_fallthru
      _
    // Predicated region
    $region34: #{diffusion_forward.17} parent=1 // pred_check
      _
    $region35: #{diffusion_forward.17} parent=1 // pred_check_branch
      %56 = sbr.rel (0) target = $region37
    $region36: #{diffusion_forward.17} parent=1 // pred_region
      _
    $region37: #{diffusion_forward.17} parent=1 // pred_fallthru
      _
    // Predicated region
    $region38: #{diffusion_forward.17} parent=1 // pred_check
      _
    $region39: #{diffusion_forward.17} parent=1 // pred_check_branch
      %58 = sbr.rel (0) target = $region41
    $region40: #{diffusion_forward.17} parent=1 // pred_region
      _
    $region41: #{diffusion_forward.17} parent=1 // pred_fallthru
      _
    // Predicated region
    $region42: #{diffusion_forward.17} parent=1 // pred_check
      _
    $region43: #{diffusion_forward.17} parent=1 // pred_check_branch
      %60 = sbr.rel (0) target = $region45
    $region44: #{diffusion_forward.17} parent=1 // pred_region
      %62 = dma.done [#allocation6], 16
    $region45: #{diffusion_forward.17} parent=1 // pred_fallthru
      _
    // Predicated region
    $region46: #{diffusion_forward.17} parent=1 // pred_check
      _
    $region47: #{diffusion_forward.17} parent=1 // pred_check_branch
      %64 = sbr.rel (0) target = $region49
    $region48: #{diffusion_forward.17} parent=1 // pred_region
      %66 = dma.done [#allocation8], 16
    $region49: #{diffusion_forward.17} parent=1 // pred_fallthru
      _
    // Predicated region
    $region50: #{diffusion_forward.17} parent=1 // pred_check
      _
    $region51: #{diffusion_forward.17} parent=1 // pred_check_branch
      %68 = sbr.rel (0) target = $region53
    $region52: #{diffusion_forward.17} parent=1 // pred_region
      %70 = dma.done [#allocation8], 16
    $region53: #{diffusion_forward.17} parent=1 // pred_fallthru
      _
    %71 = sfence
    %v72 = vlaneseq
    %v73 = vand.u32 %v72, 127
    %v74 = vadd.s32 %v73, 128
    %v75 = vadd.s32 %v73, 256
    %v76 = vadd.s32 %v73, 384
    %v77 = vand.u32 %v73, 15
    %v78 = vand.u32 %v74, 15
    %v79 = vand.u32 %v75, 15
    %v80 = vand.u32 %v76, 15
    %v81 = vshra.s32 %v73, 4
    %v82 = vshra.s32 %v74, 4
    %v83 = vshra.s32 %v75, 4
    %v84 = vshra.s32 %v76, 4
    %v85 = vand.u32 %v81, 15
    %v86 = vand.u32 %v82, 15
    %v87 = vand.u32 %v83, 15
    %v88 = vand.u32 %v84, 15
    %v89 = vshra.s32 %v73, 8
    %v90 = vshra.s32 %v74, 8
    %v91 = vshra.s32 %v75, 8
    %v92 = vshra.s32 %v76, 8
    %vm93 = vcmp.ge.s32.totalorder %v85, 1
    %vm94 = vcmp.ge.s32.totalorder %v86, 1
    %vm95 = vcmp.ge.s32.totalorder %v87, 1
    %vm96 = vcmp.ge.s32.totalorder %v88, 1
    %vm97 = vcmp.lt.s32.totalorder %v85, 17
    %vm98 = vcmp.lt.s32.totalorder %v86, 17
    %vm99 = vcmp.lt.s32.totalorder %v87, 17
    %vm100 = vcmp.lt.s32.totalorder %v88, 17
    %vm101 = vmand %vm93, %vm97
    %vm102 = vmand %vm94, %vm98
    %vm103 = vmand %vm95, %vm99
    %vm104 = vmand %vm96, %vm100
    %vm105 = vcmp.ge.s32.totalorder %v77, 1
    %vm106 = vcmp.ge.s32.totalorder %v78, 1
    %vm107 = vcmp.ge.s32.totalorder %v79, 1
    %vm108 = vcmp.ge.s32.totalorder %v80, 1
    %vm109 = vmand %vm101, %vm105
    %vm110 = vmand %vm102, %vm106
    %vm111 = vmand %vm103, %vm107
    %vm112 = vmand %vm104, %vm108
    %vm113 = vcmp.lt.s32.totalorder %v77, 17
    %vm114 = vcmp.lt.s32.totalorder %v78, 17
    %vm115 = vcmp.lt.s32.totalorder %v79, 17
    %vm116 = vcmp.lt.s32.totalorder %v80, 17
    %vm117 = vmand %vm109, %vm113
    %vm118 = vmand %vm110, %vm114
    %vm119 = vmand %vm111, %vm115
    %vm120 = vmand %vm112, %vm116
    %vm121 = vcmp.ge.s32.totalorder %v77, 0
    %vm122 = vcmp.ge.s32.totalorder %v78, 0
    %vm123 = vcmp.ge.s32.totalorder %v79, 0
    %vm124 = vcmp.ge.s32.totalorder %v80, 0
    %vm125 = vmand %vm101, %vm121
    %vm126 = vmand %vm102, %vm122
    %vm127 = vmand %vm103, %vm123
    %vm128 = vmand %vm104, %vm124
    %vm129 = vcmp.lt.s32.totalorder %v77, 16
    %vm130 = vcmp.lt.s32.totalorder %v78, 16
    %vm131 = vcmp.lt.s32.totalorder %v79, 16
    %vm132 = vcmp.lt.s32.totalorder %v80, 16
    %vm133 = vmand %vm125, %vm129
    %vm134 = vmand %vm126, %vm130
    %vm135 = vmand %vm127, %vm131
    %vm136 = vmand %vm128, %vm132
    %vm137 = vcmp.ge.s32.totalorder %v77, 4294967295
    %vm138 = vcmp.ge.s32.totalorder %v78, 4294967295
    %vm139 = vcmp.ge.s32.totalorder %v79, 4294967295
    %vm140 = vcmp.ge.s32.totalorder %v80, 4294967295
    %vm141 = vmand %vm101, %vm137
    %vm142 = vmand %vm102, %vm138
    %vm143 = vmand %vm103, %vm139
    %vm144 = vmand %vm104, %vm140
    %vm145 = vcmp.lt.s32.totalorder %v77, 15
    %vm146 = vcmp.lt.s32.totalorder %v78, 15
    %vm147 = vcmp.lt.s32.totalorder %v79, 15
    %vm148 = vcmp.lt.s32.totalorder %v80, 15
    %vm149 = vmand %vm141, %vm145
    %vm150 = vmand %vm142, %vm146
    %vm151 = vmand %vm143, %vm147
    %vm152 = vmand %vm144, %vm148
    %vm153 = vcmp.ge.s32.totalorder %v85, 0
    %vm154 = vcmp.ge.s32.totalorder %v86, 0
    %vm155 = vcmp.ge.s32.totalorder %v87, 0
    %vm156 = vcmp.ge.s32.totalorder %v88, 0
    %vm157 = vcmp.lt.s32.totalorder %v85, 16
    %vm158 = vcmp.lt.s32.totalorder %v86, 16
    %vm159 = vcmp.lt.s32.totalorder %v87, 16
    %vm160 = vcmp.lt.s32.totalorder %v88, 16
    %vm161 = vmand %vm153, %vm157
    %vm162 = vmand %vm154, %vm158
    %vm163 = vmand %vm155, %vm159
    %vm164 = vmand %vm156, %vm160
    %vm165 = vmand %vm161, %vm105
    %vm166 = vmand %vm162, %vm106
    %vm167 = vmand %vm163, %vm107
    %vm168 = vmand %vm164, %vm108
    %vm169 = vmand %vm165, %vm113
    %vm170 = vmand %vm166, %vm114
    %vm171 = vmand %vm167, %vm115
    %vm172 = vmand %vm168, %vm116
    %vm173 = vmand %vm161, %vm137
    %vm174 = vmand %vm162, %vm138
    %vm175 = vmand %vm163, %vm139
    %vm176 = vmand %vm164, %vm140
    %vm177 = vmand %vm173, %vm145
    %vm178 = vmand %vm174, %vm146
    %vm179 = vmand %vm175, %vm147
    %vm180 = vmand %vm176, %vm148
    %vm181 = vcmp.ge.s32.totalorder %v85, 4294967295
    %vm182 = vcmp.ge.s32.totalorder %v86, 4294967295
    %vm183 = vcmp.ge.s32.totalorder %v87, 4294967295
    %vm184 = vcmp.ge.s32.totalorder %v88, 4294967295
    %vm185 = vcmp.lt.s32.totalorder %v85, 15
    %vm186 = vcmp.lt.s32.totalorder %v86, 15
    %vm187 = vcmp.lt.s32.totalorder %v87, 15
    %vm188 = vcmp.lt.s32.totalorder %v88, 15
    %vm189 = vmand %vm181, %vm185
    %vm190 = vmand %vm182, %vm186
    %vm191 = vmand %vm183, %vm187
    %vm192 = vmand %vm184, %vm188
    %vm193 = vmand %vm189, %vm105
    %vm194 = vmand %vm190, %vm106
    %vm195 = vmand %vm191, %vm107
    %vm196 = vmand %vm192, %vm108
    %vm197 = vmand %vm193, %vm113
    %vm198 = vmand %vm194, %vm114
    %vm199 = vmand %vm195, %vm115
    %vm200 = vmand %vm196, %vm116
    %vm201 = vmand %vm189, %vm121
    %vm202 = vmand %vm190, %vm122
    %vm203 = vmand %vm191, %vm123
    %vm204 = vmand %vm192, %vm124
    %vm205 = vmand %vm201, %vm129
    %vm206 = vmand %vm202, %vm130
    %vm207 = vmand %vm203, %vm131
    %vm208 = vmand %vm204, %vm132
    %vm209 = vmand %vm189, %vm137
    %vm210 = vmand %vm190, %vm138
    %vm211 = vmand %vm191, %vm139
    %vm212 = vmand %vm192, %vm140
    %vm213 = vmand %vm209, %vm145
    %vm214 = vmand %vm210, %vm146
    %vm215 = vmand %vm211, %vm147
    %vm216 = vmand %vm212, %vm148
    %vm217 = vcmp.eq.s32.totalorder %v89, 0
    %vm218 = vcmp.eq.s32.totalorder %v90, 0
    %vm219 = vcmp.eq.s32.totalorder %v91, 0
    %vm220 = vcmp.eq.s32.totalorder %v92, 0
    %s221 = sld [smem:[#allocation4]]
    %s222 = sld [smem:[#allocation7 + %s221]]
    %v223 = vstv %s222
    %v224 = vsel %vm217, %v223, 0.0
    %v225 = vsel %vm218, %v223, 0.0
    %v226 = vsel %vm219, %v223, 0.0
    %v227 = vsel %vm220, %v223, 0.0
    %s228 = sld [smem:[#allocation9 + %s221]]
    %v229 = vstv %s228
    %v230 = vsel %vm217, %v229, 0.0
    %v231 = vsel %vm218, %v229, 0.0
    %v232 = vsel %vm219, %v229, 0.0
    %v233 = vsel %vm220, %v229, 0.0
    %v234 = vstv %s221
    %v235 = vsel %vm217, %v234, 0
    %v236 = vsel %vm218, %v234, 0
    %v237 = vsel %vm219, %v234, 0
    %v238 = vsel %vm220, %v234, 0
    %vm239 = vcmp.eq.s32.totalorder %v89, 1
    %vm240 = vcmp.eq.s32.totalorder %v90, 1
    %vm241 = vcmp.eq.s32.totalorder %v91, 1
    %vm242 = vcmp.eq.s32.totalorder %v92, 1
    %s243 = sld [smem:[#allocation4 + $0x1]]
    %s244 = sld [smem:[#allocation7 + %s243]]
    %v245 = vstv %s244
    %v246 = vsel %vm239, %v245, %v224
    %v247 = vsel %vm240, %v245, %v225
    %v248 = vsel %vm241, %v245, %v226
    %v249 = vsel %vm242, %v245, %v227
    %s250 = sld [smem:[#allocation9 + %s243]]
    %v251 = vstv %s250
    %v252 = vsel %vm239, %v251, %v230
    %v253 = vsel %vm240, %v251, %v231
    %v254 = vsel %vm241, %v251, %v232
    %v255 = vsel %vm242, %v251, %v233
    %v256 = vstv %s243
    %v257 = vsel %vm239, %v256, %v235
    %v258 = vsel %vm240, %v256, %v236
    %v259 = vsel %vm241, %v256, %v237
    %v260 = vsel %vm242, %v256, %v238
    %v261 = vlaneseq
    %v262 = vshrl.u32 %v261, 7
    %v263 = vadd.s32 %v262, 8
    %vm264 = vcmp.eq.s32.totalorder %v262, %v257
    %vm265 = vcmp.eq.s32.totalorder %v262, %v258
    %vm266 = vcmp.eq.s32.totalorder %v262, %v259
    %vm267 = vcmp.eq.s32.totalorder %v262, %v260
    %vm268 = vcmp.eq.s32.totalorder %v263, %v257
    %vm269 = vcmp.eq.s32.totalorder %v263, %v258
    %vm270 = vcmp.eq.s32.totalorder %v263, %v259
    %vm271 = vcmp.eq.s32.totalorder %v263, %v260
    %v272 = vsel %vm264, 1, 0
    %v273 = vsel %vm265, 1, 0
    %v274 = vsel %vm266, 1, 0
    %v275 = vsel %vm267, 1, 0
    %v276 = vsel %vm268, 1, 0
    %v277 = vsel %vm269, 1, 0
    %v278 = vsel %vm270, 1, 0
    %v279 = vsel %vm271, 1, 0
    %v280 = vcvt.s32.f32 %v272
    %v281 = vcvt.s32.f32 %v273
    %v282 = vcvt.s32.f32 %v274
    %v283 = vcvt.s32.f32 %v275
    %v284 = vcvt.s32.f32 %v276
    %v285 = vcvt.s32.f32 %v277
    %v286 = vcvt.s32.f32 %v278
    %v287 = vcvt.s32.f32 %v279
    %v288 = vld [vmem:[%s9] sm:$0xff]
    %v289 = vld [vmem:[%s9 + $0x8] sm:$0xff]
    %vm290 = vcmask 130048
    %v292 = vsel %vm290, %v288, 0
    %v295 = vsel %vm290, %v289, 0
    %297 = vmatpush.msra.mxu0 0.0
    %298 = vmatpush.msra.mxu0 0.0
    %299 = vmatpush.msra.mxu0 0.0
    %300 = vmatpush.msra.mxu0 0.0
    %301 = vmatpush.msra.mxu0 0.0
    %302 = vmatpush.msra.mxu0 0.0
    %303 = vmatpush.msra.mxu0 0.0
    %304 = vmatpush.msra.mxu0 0.0
    %305 = vmatpush.msra.mxu0 0.0
    %306 = vmatpush.msra.mxu0 0.0
    %307 = vmatpush.msra.mxu0 0.0
    %308 = vmatpush.msra.mxu0 0.0
    %309 = vmatpush.msra.mxu0 0.0
    %310 = vmatpush.msra.mxu0 0.0
    %v311 = vand.u32 %v284, 4294901760
    %312 = vmatpush.msra.mxu0 %v311
    %v313 = vand.u32 %v280, 4294901760
    %314 = vmatpush.msra.mxu0 %v313
    %v315 = vand.u32 %v292, 4294901760
    %v316 = vsub.f32 %v292, %v315
    %v317 = vand.u32 %v316, 4294901760
    %v318 = vsub.f32 %v316, %v317
    %v319 = vand.u32 %v318, 4294901760
    %320 = vmatmul.f32.gmra.mxu0 %v319
    %v321 = vpop.f32.mrf.mxu0
    %v322 = vadd.f32 0.0, %v321
    %v323 = vand.u32 %v295, 4294901760
    %v324 = vsub.f32 %v295, %v323
    %v325 = vand.u32 %v324, 4294901760
    %v326 = vsub.f32 %v324, %v325
    %v327 = vand.u32 %v326, 4294901760
    %328 = vmatmul.f32.gmra.mxu0 %v327
    %v329 = vpop.f32.mrf.mxu0
    %v330 = vadd.f32 0.0, %v329
    %331 = vdwg.mxu0
    %332 = vmatpush.msra.mxu0 0.0
    %333 = vmatpush.msra.mxu0 0.0
    %334 = vmatpush.msra.mxu0 0.0
    %335 = vmatpush.msra.mxu0 0.0
    %336 = vmatpush.msra.mxu0 0.0
    %337 = vmatpush.msra.mxu0 0.0
    %338 = vmatpush.msra.mxu0 0.0
    %339 = vmatpush.msra.mxu0 0.0
    %340 = vmatpush.msra.mxu0 0.0
    %341 = vmatpush.msra.mxu0 0.0
    %342 = vmatpush.msra.mxu0 0.0
    %343 = vmatpush.msra.mxu0 0.0
    %344 = vmatpush.msra.mxu0 0.0
    %345 = vmatpush.msra.mxu0 0.0
    %v346 = vand.u32 %v284, 4294901760
    %v347 = vsub.f32 %v284, %v346
    %v348 = vand.u32 %v347, 4294901760
    %v349 = vsub.f32 %v347, %v348
    %v350 = vand.u32 %v349, 4294901760
    %351 = vmatpush.msra.mxu0 %v350
    %v352 = vand.u32 %v280, 4294901760
    %v353 = vsub.f32 %v280, %v352
    %v354 = vand.u32 %v353, 4294901760
    %v355 = vsub.f32 %v353, %v354
    %v356 = vand.u32 %v355, 4294901760
    %357 = vmatpush.msra.mxu0 %v356
    %v358 = vand.u32 %v292, 4294901760
    %359 = vmatmul.f32.gmra.mxu0 %v358
    %v360 = vpop.f32.mrf.mxu0
    %v361 = vadd.f32 %v322, %v360
    %v362 = vand.u32 %v295, 4294901760
    %363 = vmatmul.f32.gmra.mxu0 %v362
    %v364 = vpop.f32.mrf.mxu0
    %v365 = vadd.f32 %v330, %v364
    %366 = vdwg.mxu0
    %367 = vmatpush.msra.mxu0 0.0
    %368 = vmatpush.msra.mxu0 0.0
    %369 = vmatpush.msra.mxu0 0.0
    %370 = vmatpush.msra.mxu0 0.0
    %371 = vmatpush.msra.mxu0 0.0
    %372 = vmatpush.msra.mxu0 0.0
    %373 = vmatpush.msra.mxu0 0.0
    %374 = vmatpush.msra.mxu0 0.0
    %375 = vmatpush.msra.mxu0 0.0
    %376 = vmatpush.msra.mxu0 0.0
    %377 = vmatpush.msra.mxu0 0.0
    %378 = vmatpush.msra.mxu0 0.0
    %379 = vmatpush.msra.mxu0 0.0
    %380 = vmatpush.msra.mxu0 0.0
    %v381 = vand.u32 %v284, 4294901760
    %v382 = vsub.f32 %v284, %v381
    %383 = vmatpush.msra.mxu0 %v382
    %v384 = vand.u32 %v280, 4294901760
    %v385 = vsub.f32 %v280, %v384
    %386 = vmatpush.msra.mxu0 %v385
    %v387 = vand.u32 %v292, 4294901760
    %v388 = vsub.f32 %v292, %v387
    %389 = vmatmul.f32.gmra.mxu0 %v388
    %v390 = vpop.f32.mrf.mxu0
    %v391 = vadd.f32 %v361, %v390
    %v392 = vand.u32 %v295, 4294901760
    %v393 = vsub.f32 %v295, %v392
    %394 = vmatmul.f32.gmra.mxu0 %v393
    %v395 = vpop.f32.mrf.mxu0
    %v396 = vadd.f32 %v365, %v395
    %397 = vdwg.mxu0
    %398 = vmatpush.msra.mxu0 0.0
    %399 = vmatpush.msra.mxu0 0.0
    %400 = vmatpush.msra.mxu0 0.0
    %401 = vmatpush.msra.mxu0 0.0
    %402 = vmatpush.msra.mxu0 0.0
    %403 = vmatpush.msra.mxu0 0.0
    %404 = vmatpush.msra.mxu0 0.0
    %405 = vmatpush.msra.mxu0 0.0
    %406 = vmatpush.msra.mxu0 0.0
    %407 = vmatpush.msra.mxu0 0.0
    %408 = vmatpush.msra.mxu0 0.0
    %409 = vmatpush.msra.mxu0 0.0
    %410 = vmatpush.msra.mxu0 0.0
    %411 = vmatpush.msra.mxu0 0.0
    %v412 = vand.u32 %v284, 4294901760
    %413 = vmatpush.msra.mxu0 %v412
    %v414 = vand.u32 %v280, 4294901760
    %415 = vmatpush.msra.mxu0 %v414
    %v416 = vand.u32 %v292, 4294901760
    %v417 = vsub.f32 %v292, %v416
    %v418 = vand.u32 %v417, 4294901760
    %419 = vmatmul.f32.gmra.mxu0 %v418
    %v420 = vpop.f32.mrf.mxu0
    %v421 = vadd.f32 %v391, %v420
    %v422 = vand.u32 %v295, 4294901760
    %v423 = vsub.f32 %v295, %v422
    %v424 = vand.u32 %v423, 4294901760
    %425 = vmatmul.f32.gmra.mxu0 %v424
    %v426 = vpop.f32.mrf.mxu0
    %v427 = vadd.f32 %v396, %v426
    %428 = vdwg.mxu0
    %429 = vmatpush.msra.mxu0 0.0
    %430 = vmatpush.msra.mxu0 0.0
    %431 = vmatpush.msra.mxu0 0.0
    %432 = vmatpush.msra.mxu0 0.0
    %433 = vmatpush.msra.mxu0 0.0
    %434 = vmatpush.msra.mxu0 0.0
    %435 = vmatpush.msra.mxu0 0.0
    %436 = vmatpush.msra.mxu0 0.0
    %437 = vmatpush.msra.mxu0 0.0
    %438 = vmatpush.msra.mxu0 0.0
    %439 = vmatpush.msra.mxu0 0.0
    %440 = vmatpush.msra.mxu0 0.0
    %441 = vmatpush.msra.mxu0 0.0
    %442 = vmatpush.msra.mxu0 0.0
    %v443 = vand.u32 %v284, 4294901760
    %v444 = vsub.f32 %v284, %v443
    %v445 = vand.u32 %v444, 4294901760
    %446 = vmatpush.msra.mxu0 %v445
    %v447 = vand.u32 %v280, 4294901760
    %v448 = vsub.f32 %v280, %v447
    %v449 = vand.u32 %v448, 4294901760
    %450 = vmatpush.msra.mxu0 %v449
    %v451 = vand.u32 %v292, 4294901760
    %452 = vmatmul.f32.gmra.mxu0 %v451
    %v453 = vpop.f32.mrf.mxu0
    %v454 = vadd.f32 %v421, %v453
    %v455 = vand.u32 %v295, 4294901760
    %456 = vmatmul.f32.gmra.mxu0 %v455
    %v457 = vpop.f32.mrf.mxu0
    %v458 = vadd.f32 %v427, %v457
    %459 = vdwg.mxu0
    %460 = vmatpush.msra.mxu0 0.0
    %461 = vmatpush.msra.mxu0 0.0
    %462 = vmatpush.msra.mxu0 0.0
    %463 = vmatpush.msra.mxu0 0.0
    %464 = vmatpush.msra.mxu0 0.0
    %465 = vmatpush.msra.mxu0 0.0
    %466 = vmatpush.msra.mxu0 0.0
    %467 = vmatpush.msra.mxu0 0.0
    %468 = vmatpush.msra.mxu0 0.0
    %469 = vmatpush.msra.mxu0 0.0
    %470 = vmatpush.msra.mxu0 0.0
    %471 = vmatpush.msra.mxu0 0.0
    %472 = vmatpush.msra.mxu0 0.0
    %473 = vmatpush.msra.mxu0 0.0
    %v474 = vand.u32 %v284, 4294901760
    %475 = vmatpush.msra.mxu0 %v474
    %v476 = vand.u32 %v280, 4294901760
    %477 = vmatpush.msra.mxu0 %v476
    %v478 = vand.u32 %v292, 4294901760
    %479 = vmatmul.f32.gmra.mxu0 %v478
    %v480 = vpop.f32.mrf.mxu0
    %v481 = vadd.f32 %v454, %v480
    %v482 = vand.u32 %v295, 4294901760
    %483 = vmatmul.f32.gmra.mxu0 %v482
    %v484 = vpop.f32.mrf.mxu0
    %v485 = vadd.f32 %v458, %v484
    %486 = vdwg.mxu0
    %487 = vmatpush.msra.mxu0 0.0
    %488 = vmatpush.msra.mxu0 0.0
    %489 = vmatpush.msra.mxu0 0.0
    %490 = vmatpush.msra.mxu0 0.0
    %491 = vmatpush.msra.mxu0 0.0
    %492 = vmatpush.msra.mxu0 0.0
    %493 = vmatpush.msra.mxu0 0.0
    %494 = vmatpush.msra.mxu0 0.0
    %495 = vmatpush.msra.mxu0 0.0
    %496 = vmatpush.msra.mxu0 0.0
    %497 = vmatpush.msra.mxu0 0.0
    %498 = vmatpush.msra.mxu0 0.0
    %499 = vmatpush.msra.mxu0 0.0
    %500 = vmatpush.msra.mxu0 0.0
    %v501 = vand.u32 %v285, 4294901760
    %502 = vmatpush.msra.mxu0 %v501
    %v503 = vand.u32 %v281, 4294901760
    %504 = vmatpush.msra.mxu0 %v503
    %v505 = vand.u32 %v292, 4294901760
    %v506 = vsub.f32 %v292, %v505
    %v507 = vand.u32 %v506, 4294901760
    %v508 = vsub.f32 %v506, %v507
    %v509 = vand.u32 %v508, 4294901760
    %510 = vmatmul.f32.gmra.mxu0 %v509
    %v511 = vpop.f32.mrf.mxu0
    %v512 = vadd.f32 0.0, %v511
    %v513 = vand.u32 %v295, 4294901760
    %v514 = vsub.f32 %v295, %v513
    %v515 = vand.u32 %v514, 4294901760
    %v516 = vsub.f32 %v514, %v515
    %v517 = vand.u32 %v516, 4294901760
    %518 = vmatmul.f32.gmra.mxu0 %v517
    %v519 = vpop.f32.mrf.mxu0
    %v520 = vadd.f32 0.0, %v519
    %521 = vdwg.mxu0
    %522 = vmatpush.msra.mxu0 0.0
    %523 = vmatpush.msra.mxu0 0.0
    %524 = vmatpush.msra.mxu0 0.0
    %525 = vmatpush.msra.mxu0 0.0
    %526 = vmatpush.msra.mxu0 0.0
    %527 = vmatpush.msra.mxu0 0.0
    %528 = vmatpush.msra.mxu0 0.0
    %529 = vmatpush.msra.mxu0 0.0
    %530 = vmatpush.msra.mxu0 0.0
    %531 = vmatpush.msra.mxu0 0.0
    %532 = vmatpush.msra.mxu0 0.0
    %533 = vmatpush.msra.mxu0 0.0
    %534 = vmatpush.msra.mxu0 0.0
    %535 = vmatpush.msra.mxu0 0.0
    %v536 = vand.u32 %v285, 4294901760
    %v537 = vsub.f32 %v285, %v536
    %v538 = vand.u32 %v537, 4294901760
    %v539 = vsub.f32 %v537, %v538
    %v540 = vand.u32 %v539, 4294901760
    %541 = vmatpush.msra.mxu0 %v540
    %v542 = vand.u32 %v281, 4294901760
    %v543 = vsub.f32 %v281, %v542
    %v544 = vand.u32 %v543, 4294901760
    %v545 = vsub.f32 %v543, %v544
    %v546 = vand.u32 %v545, 4294901760
    %547 = vmatpush.msra.mxu0 %v546
    %v548 = vand.u32 %v292, 4294901760
    %549 = vmatmul.f32.gmra.mxu0 %v548
    %v550 = vpop.f32.mrf.mxu0
    %v551 = vadd.f32 %v512, %v550
    %v552 = vand.u32 %v295, 4294901760
    %553 = vmatmul.f32.gmra.mxu0 %v552
    %v554 = vpop.f32.mrf.mxu0
    %v555 = vadd.f32 %v520, %v554
    %556 = vdwg.mxu0
    %557 = vmatpush.msra.mxu0 0.0
    %558 = vmatpush.msra.mxu0 0.0
    %559 = vmatpush.msra.mxu0 0.0
    %560 = vmatpush.msra.mxu0 0.0
    %561 = vmatpush.msra.mxu0 0.0
    %562 = vmatpush.msra.mxu0 0.0
    %563 = vmatpush.msra.mxu0 0.0
    %564 = vmatpush.msra.mxu0 0.0
    %565 = vmatpush.msra.mxu0 0.0
    %566 = vmatpush.msra.mxu0 0.0
    %567 = vmatpush.msra.mxu0 0.0
    %568 = vmatpush.msra.mxu0 0.0
    %569 = vmatpush.msra.mxu0 0.0
    %570 = vmatpush.msra.mxu0 0.0
    %v571 = vand.u32 %v285, 4294901760
    %v572 = vsub.f32 %v285, %v571
    %573 = vmatpush.msra.mxu0 %v572
    %v574 = vand.u32 %v281, 4294901760
    %v575 = vsub.f32 %v281, %v574
    %576 = vmatpush.msra.mxu0 %v575
    %v577 = vand.u32 %v292, 4294901760
    %v578 = vsub.f32 %v292, %v577
    %579 = vmatmul.f32.gmra.mxu0 %v578
    %v580 = vpop.f32.mrf.mxu0
    %v581 = vadd.f32 %v551, %v580
    %v582 = vand.u32 %v295, 4294901760
    %v583 = vsub.f32 %v295, %v582
    %584 = vmatmul.f32.gmra.mxu0 %v583
    %v585 = vpop.f32.mrf.mxu0
    %v586 = vadd.f32 %v555, %v585
    %587 = vdwg.mxu0
    %588 = vmatpush.msra.mxu0 0.0
    %589 = vmatpush.msra.mxu0 0.0
    %590 = vmatpush.msra.mxu0 0.0
    %591 = vmatpush.msra.mxu0 0.0
    %592 = vmatpush.msra.mxu0 0.0
    %593 = vmatpush.msra.mxu0 0.0
    %594 = vmatpush.msra.mxu0 0.0
    %595 = vmatpush.msra.mxu0 0.0
    %596 = vmatpush.msra.mxu0 0.0
    %597 = vmatpush.msra.mxu0 0.0
    %598 = vmatpush.msra.mxu0 0.0
    %599 = vmatpush.msra.mxu0 0.0
    %600 = vmatpush.msra.mxu0 0.0
    %601 = vmatpush.msra.mxu0 0.0
    %v602 = vand.u32 %v285, 4294901760
    %603 = vmatpush.msra.mxu0 %v602
    %v604 = vand.u32 %v281, 4294901760
    %605 = vmatpush.msra.mxu0 %v604
    %v606 = vand.u32 %v292, 4294901760
    %v607 = vsub.f32 %v292, %v606
    %v608 = vand.u32 %v607, 4294901760
    %609 = vmatmul.f32.gmra.mxu0 %v608
    %v610 = vpop.f32.mrf.mxu0
    %v611 = vadd.f32 %v581, %v610
    %v612 = vand.u32 %v295, 4294901760
    %v613 = vsub.f32 %v295, %v612
    %v614 = vand.u32 %v613, 4294901760
    %615 = vmatmul.f32.gmra.mxu0 %v614
    %v616 = vpop.f32.mrf.mxu0
    %v617 = vadd.f32 %v586, %v616
    %618 = vdwg.mxu0
    %619 = vmatpush.msra.mxu0 0.0
    %620 = vmatpush.msra.mxu0 0.0
    %621 = vmatpush.msra.mxu0 0.0
    %622 = vmatpush.msra.mxu0 0.0
    %623 = vmatpush.msra.mxu0 0.0
    %624 = vmatpush.msra.mxu0 0.0
    %625 = vmatpush.msra.mxu0 0.0
    %626 = vmatpush.msra.mxu0 0.0
    %627 = vmatpush.msra.mxu0 0.0
    %628 = vmatpush.msra.mxu0 0.0
    %629 = vmatpush.msra.mxu0 0.0
    %630 = vmatpush.msra.mxu0 0.0
    %631 = vmatpush.msra.mxu0 0.0
    %632 = vmatpush.msra.mxu0 0.0
    %v633 = vand.u32 %v285, 4294901760
    %v634 = vsub.f32 %v285, %v633
    %v635 = vand.u32 %v634, 4294901760
    %636 = vmatpush.msra.mxu0 %v635
    %v637 = vand.u32 %v281, 4294901760
    %v638 = vsub.f32 %v281, %v637
    %v639 = vand.u32 %v638, 4294901760
    %640 = vmatpush.msra.mxu0 %v639
    %v641 = vand.u32 %v292, 4294901760
    %642 = vmatmul.f32.gmra.mxu0 %v641
    %v643 = vpop.f32.mrf.mxu0
    %v644 = vadd.f32 %v611, %v643
    %v645 = vand.u32 %v295, 4294901760
    %646 = vmatmul.f32.gmra.mxu0 %v645
    %v647 = vpop.f32.mrf.mxu0
    %v648 = vadd.f32 %v617, %v647
    %649 = vdwg.mxu0
    %650 = vmatpush.msra.mxu0 0.0
    %651 = vmatpush.msra.mxu0 0.0
    %652 = vmatpush.msra.mxu0 0.0
    %653 = vmatpush.msra.mxu0 0.0
    %654 = vmatpush.msra.mxu0 0.0
    %655 = vmatpush.msra.mxu0 0.0
    %656 = vmatpush.msra.mxu0 0.0
    %657 = vmatpush.msra.mxu0 0.0
    %658 = vmatpush.msra.mxu0 0.0
    %659 = vmatpush.msra.mxu0 0.0
    %660 = vmatpush.msra.mxu0 0.0
    %661 = vmatpush.msra.mxu0 0.0
    %662 = vmatpush.msra.mxu0 0.0
    %663 = vmatpush.msra.mxu0 0.0
    %v664 = vand.u32 %v285, 4294901760
    %665 = vmatpush.msra.mxu0 %v664
    %v666 = vand.u32 %v281, 4294901760
    %667 = vmatpush.msra.mxu0 %v666
    %v668 = vand.u32 %v292, 4294901760
    %669 = vmatmul.f32.gmra.mxu0 %v668
    %v670 = vpop.f32.mrf.mxu0
    %v671 = vadd.f32 %v644, %v670
    %v672 = vand.u32 %v295, 4294901760
    %673 = vmatmul.f32.gmra.mxu0 %v672
    %v674 = vpop.f32.mrf.mxu0
    %v675 = vadd.f32 %v648, %v674
    %676 = vdwg.mxu0
    %677 = vmatpush.msra.mxu0 0.0
    %678 = vmatpush.msra.mxu0 0.0
    %679 = vmatpush.msra.mxu0 0.0
    %680 = vmatpush.msra.mxu0 0.0
    %681 = vmatpush.msra.mxu0 0.0
    %682 = vmatpush.msra.mxu0 0.0
    %683 = vmatpush.msra.mxu0 0.0
    %684 = vmatpush.msra.mxu0 0.0
    %685 = vmatpush.msra.mxu0 0.0
    %686 = vmatpush.msra.mxu0 0.0
    %687 = vmatpush.msra.mxu0 0.0
    %688 = vmatpush.msra.mxu0 0.0
    %689 = vmatpush.msra.mxu0 0.0
    %690 = vmatpush.msra.mxu0 0.0
    %v691 = vand.u32 %v286, 4294901760
    %692 = vmatpush.msra.mxu0 %v691
    %v693 = vand.u32 %v282, 4294901760
    %694 = vmatpush.msra.mxu0 %v693
    %v695 = vand.u32 %v292, 4294901760
    %v696 = vsub.f32 %v292, %v695
    %v697 = vand.u32 %v696, 4294901760
    %v698 = vsub.f32 %v696, %v697
    %v699 = vand.u32 %v698, 4294901760
    %700 = vmatmul.f32.gmra.mxu0 %v699
    %v701 = vpop.f32.mrf.mxu0
    %v702 = vadd.f32 0.0, %v701
    %v703 = vand.u32 %v295, 4294901760
    %v704 = vsub.f32 %v295, %v703
    %v705 = vand.u32 %v704, 4294901760
    %v706 = vsub.f32 %v704, %v705
    %v707 = vand.u32 %v706, 4294901760
    %708 = vmatmul.f32.gmra.mxu0 %v707
    %v709 = vpop.f32.mrf.mxu0
    %v710 = vadd.f32 0.0, %v709
    %711 = vdwg.mxu0
    %712 = vmatpush.msra.mxu0 0.0
    %713 = vmatpush.msra.mxu0 0.0
    %714 = vmatpush.msra.mxu0 0.0
    %715 = vmatpush.msra.mxu0 0.0
    %716 = vmatpush.msra.mxu0 0.0
    %717 = vmatpush.msra.mxu0 0.0
    %718 = vmatpush.msra.mxu0 0.0
    %719 = vmatpush.msra.mxu0 0.0
    %720 = vmatpush.msra.mxu0 0.0
    %721 = vmatpush.msra.mxu0 0.0
    %722 = vmatpush.msra.mxu0 0.0
    %723 = vmatpush.msra.mxu0 0.0
    %724 = vmatpush.msra.mxu0 0.0
    %725 = vmatpush.msra.mxu0 0.0
    %v726 = vand.u32 %v286, 4294901760
    %v727 = vsub.f32 %v286, %v726
    %v728 = vand.u32 %v727, 4294901760
    %v729 = vsub.f32 %v727, %v728
    %v730 = vand.u32 %v729, 4294901760
    %731 = vmatpush.msra.mxu0 %v730
    %v732 = vand.u32 %v282, 4294901760
    %v733 = vsub.f32 %v282, %v732
    %v734 = vand.u32 %v733, 4294901760
    %v735 = vsub.f32 %v733, %v734
    %v736 = vand.u32 %v735, 4294901760
    %737 = vmatpush.msra.mxu0 %v736
    %v738 = vand.u32 %v292, 4294901760
    %739 = vmatmul.f32.gmra.mxu0 %v738
    %v740 = vpop.f32.mrf.mxu0
    %v741 = vadd.f32 %v702, %v740
    %v742 = vand.u32 %v295, 4294901760
    %743 = vmatmul.f32.gmra.mxu0 %v742
    %v744 = vpop.f32.mrf.mxu0
    %v745 = vadd.f32 %v710, %v744
    %746 = vdwg.mxu0
    %747 = vmatpush.msra.mxu0 0.0
    %748 = vmatpush.msra.mxu0 0.0
    %749 = vmatpush.msra.mxu0 0.0
    %750 = vmatpush.msra.mxu0 0.0
    %751 = vmatpush.msra.mxu0 0.0
    %752 = vmatpush.msra.mxu0 0.0
    %753 = vmatpush.msra.mxu0 0.0
    %754 = vmatpush.msra.mxu0 0.0
    %755 = vmatpush.msra.mxu0 0.0
    %756 = vmatpush.msra.mxu0 0.0
    %757 = vmatpush.msra.mxu0 0.0
    %758 = vmatpush.msra.mxu0 0.0
    %759 = vmatpush.msra.mxu0 0.0
    %760 = vmatpush.msra.mxu0 0.0
    %v761 = vand.u32 %v286, 4294901760
    %v762 = vsub.f32 %v286, %v761
    %763 = vmatpush.msra.mxu0 %v762
    %v764 = vand.u32 %v282, 4294901760
    %v765 = vsub.f32 %v282, %v764
    %766 = vmatpush.msra.mxu0 %v765
    %v767 = vand.u32 %v292, 4294901760
    %v768 = vsub.f32 %v292, %v767
    %769 = vmatmul.f32.gmra.mxu0 %v768
    %v770 = vpop.f32.mrf.mxu0
    %v771 = vadd.f32 %v741, %v770
    %v772 = vand.u32 %v295, 4294901760
    %v773 = vsub.f32 %v295, %v772
    %774 = vmatmul.f32.gmra.mxu0 %v773
    %v775 = vpop.f32.mrf.mxu0
    %v776 = vadd.f32 %v745, %v775
    %777 = vdwg.mxu0
    %778 = vmatpush.msra.mxu0 0.0
    %779 = vmatpush.msra.mxu0 0.0
    %780 = vmatpush.msra.mxu0 0.0
    %781 = vmatpush.msra.mxu0 0.0
    %782 = vmatpush.msra.mxu0 0.0
    %783 = vmatpush.msra.mxu0 0.0
    %784 = vmatpush.msra.mxu0 0.0
    %785 = vmatpush.msra.mxu0 0.0
    %786 = vmatpush.msra.mxu0 0.0
    %787 = vmatpush.msra.mxu0 0.0
    %788 = vmatpush.msra.mxu0 0.0
    %789 = vmatpush.msra.mxu0 0.0
    %790 = vmatpush.msra.mxu0 0.0
    %791 = vmatpush.msra.mxu0 0.0
    %v792 = vand.u32 %v286, 4294901760
    %793 = vmatpush.msra.mxu0 %v792
    %v794 = vand.u32 %v282, 4294901760
    %795 = vmatpush.msra.mxu0 %v794
    %v796 = vand.u32 %v292, 4294901760
    %v797 = vsub.f32 %v292, %v796
    %v798 = vand.u32 %v797, 4294901760
    %799 = vmatmul.f32.gmra.mxu0 %v798
    %v800 = vpop.f32.mrf.mxu0
    %v801 = vadd.f32 %v771, %v800
    %v802 = vand.u32 %v295, 4294901760
    %v803 = vsub.f32 %v295, %v802
    %v804 = vand.u32 %v803, 4294901760
    %805 = vmatmul.f32.gmra.mxu0 %v804
    %v806 = vpop.f32.mrf.mxu0
    %v807 = vadd.f32 %v776, %v806
    %808 = vdwg.mxu0
    %809 = vmatpush.msra.mxu0 0.0
    %810 = vmatpush.msra.mxu0 0.0
    %811 = vmatpush.msra.mxu0 0.0
    %812 = vmatpush.msra.mxu0 0.0
    %813 = vmatpush.msra.mxu0 0.0
    %814 = vmatpush.msra.mxu0 0.0
    %815 = vmatpush.msra.mxu0 0.0
    %816 = vmatpush.msra.mxu0 0.0
    %817 = vmatpush.msra.mxu0 0.0
    %818 = vmatpush.msra.mxu0 0.0
    %819 = vmatpush.msra.mxu0 0.0
    %820 = vmatpush.msra.mxu0 0.0
    %821 = vmatpush.msra.mxu0 0.0
    %822 = vmatpush.msra.mxu0 0.0
    %v823 = vand.u32 %v286, 4294901760
    %v824 = vsub.f32 %v286, %v823
    %v825 = vand.u32 %v824, 4294901760
    %826 = vmatpush.msra.mxu0 %v825
    %v827 = vand.u32 %v282, 4294901760
    %v828 = vsub.f32 %v282, %v827
    %v829 = vand.u32 %v828, 4294901760
    %830 = vmatpush.msra.mxu0 %v829
    %v831 = vand.u32 %v292, 4294901760
    %832 = vmatmul.f32.gmra.mxu0 %v831
    %v833 = vpop.f32.mrf.mxu0
    %v834 = vadd.f32 %v801, %v833
    %v835 = vand.u32 %v295, 4294901760
    %836 = vmatmul.f32.gmra.mxu0 %v835
    %v837 = vpop.f32.mrf.mxu0
    %v838 = vadd.f32 %v807, %v837
    %839 = vdwg.mxu0
    %840 = vmatpush.msra.mxu0 0.0
    %841 = vmatpush.msra.mxu0 0.0
    %842 = vmatpush.msra.mxu0 0.0
    %843 = vmatpush.msra.mxu0 0.0
    %844 = vmatpush.msra.mxu0 0.0
    %845 = vmatpush.msra.mxu0 0.0
    %846 = vmatpush.msra.mxu0 0.0
    %847 = vmatpush.msra.mxu0 0.0
    %848 = vmatpush.msra.mxu0 0.0
    %849 = vmatpush.msra.mxu0 0.0
    %850 = vmatpush.msra.mxu0 0.0
    %851 = vmatpush.msra.mxu0 0.0
    %852 = vmatpush.msra.mxu0 0.0
    %853 = vmatpush.msra.mxu0 0.0
    %v854 = vand.u32 %v286, 4294901760
    %855 = vmatpush.msra.mxu0 %v854
    %v856 = vand.u32 %v282, 4294901760
    %857 = vmatpush.msra.mxu0 %v856
    %v858 = vand.u32 %v292, 4294901760
    %859 = vmatmul.f32.gmra.mxu0 %v858
    %v860 = vpop.f32.mrf.mxu0
    %v861 = vadd.f32 %v834, %v860
    %v862 = vand.u32 %v295, 4294901760
    %863 = vmatmul.f32.gmra.mxu0 %v862
    %v864 = vpop.f32.mrf.mxu0
    %v865 = vadd.f32 %v838, %v864
    %866 = vdwg.mxu0
    %867 = vmatpush.msra.mxu0 0.0
    %868 = vmatpush.msra.mxu0 0.0
    %869 = vmatpush.msra.mxu0 0.0
    %870 = vmatpush.msra.mxu0 0.0
    %871 = vmatpush.msra.mxu0 0.0
    %872 = vmatpush.msra.mxu0 0.0
    %873 = vmatpush.msra.mxu0 0.0
    %874 = vmatpush.msra.mxu0 0.0
    %875 = vmatpush.msra.mxu0 0.0
    %876 = vmatpush.msra.mxu0 0.0
    %877 = vmatpush.msra.mxu0 0.0
    %878 = vmatpush.msra.mxu0 0.0
    %879 = vmatpush.msra.mxu0 0.0
    %880 = vmatpush.msra.mxu0 0.0
    %v881 = vand.u32 %v287, 4294901760
    %882 = vmatpush.msra.mxu0 %v881
    %v883 = vand.u32 %v283, 4294901760
    %884 = vmatpush.msra.mxu0 %v883
    %v885 = vand.u32 %v292, 4294901760
    %v886 = vsub.f32 %v292, %v885
    %v887 = vand.u32 %v886, 4294901760
    %v888 = vsub.f32 %v886, %v887
    %v889 = vand.u32 %v888, 4294901760
    %890 = vmatmul.f32.gmra.mxu0 %v889
    %v891 = vpop.f32.mrf.mxu0
    %v892 = vadd.f32 0.0, %v891
    %v893 = vand.u32 %v295, 4294901760
    %v894 = vsub.f32 %v295, %v893
    %v895 = vand.u32 %v894, 4294901760
    %v896 = vsub.f32 %v894, %v895
    %v897 = vand.u32 %v896, 4294901760
    %898 = vmatmul.f32.gmra.mxu0 %v897
    %v899 = vpop.f32.mrf.mxu0
    %v900 = vadd.f32 0.0, %v899
    %901 = vdwg.mxu0
    %902 = vmatpush.msra.mxu0 0.0
    %903 = vmatpush.msra.mxu0 0.0
    %904 = vmatpush.msra.mxu0 0.0
    %905 = vmatpush.msra.mxu0 0.0
    %906 = vmatpush.msra.mxu0 0.0
    %907 = vmatpush.msra.mxu0 0.0
    %908 = vmatpush.msra.mxu0 0.0
    %909 = vmatpush.msra.mxu0 0.0
    %910 = vmatpush.msra.mxu0 0.0
    %911 = vmatpush.msra.mxu0 0.0
    %912 = vmatpush.msra.mxu0 0.0
    %913 = vmatpush.msra.mxu0 0.0
    %914 = vmatpush.msra.mxu0 0.0
    %915 = vmatpush.msra.mxu0 0.0
    %v916 = vand.u32 %v287, 4294901760
    %v917 = vsub.f32 %v287, %v916
    %v918 = vand.u32 %v917, 4294901760
    %v919 = vsub.f32 %v917, %v918
    %v920 = vand.u32 %v919, 4294901760
    %921 = vmatpush.msra.mxu0 %v920
    %v922 = vand.u32 %v283, 4294901760
    %v923 = vsub.f32 %v283, %v922
    %v924 = vand.u32 %v923, 4294901760
    %v925 = vsub.f32 %v923, %v924
    %v926 = vand.u32 %v925, 4294901760
    %927 = vmatpush.msra.mxu0 %v926
    %v928 = vand.u32 %v292, 4294901760
    %929 = vmatmul.f32.gmra.mxu0 %v928
    %v930 = vpop.f32.mrf.mxu0
    %v931 = vadd.f32 %v892, %v930
    %v932 = vand.u32 %v295, 4294901760
    %933 = vmatmul.f32.gmra.mxu0 %v932
    %v934 = vpop.f32.mrf.mxu0
    %v935 = vadd.f32 %v900, %v934
    %936 = vdwg.mxu0
    %937 = vmatpush.msra.mxu0 0.0
    %938 = vmatpush.msra.mxu0 0.0
    %939 = vmatpush.msra.mxu0 0.0
    %940 = vmatpush.msra.mxu0 0.0
    %941 = vmatpush.msra.mxu0 0.0
    %942 = vmatpush.msra.mxu0 0.0
    %943 = vmatpush.msra.mxu0 0.0
    %944 = vmatpush.msra.mxu0 0.0
    %945 = vmatpush.msra.mxu0 0.0
    %946 = vmatpush.msra.mxu0 0.0
    %947 = vmatpush.msra.mxu0 0.0
    %948 = vmatpush.msra.mxu0 0.0
    %949 = vmatpush.msra.mxu0 0.0
    %950 = vmatpush.msra.mxu0 0.0
    %v951 = vand.u32 %v287, 4294901760
    %v952 = vsub.f32 %v287, %v951
    %953 = vmatpush.msra.mxu0 %v952
    %v954 = vand.u32 %v283, 4294901760
    %v955 = vsub.f32 %v283, %v954
    %956 = vmatpush.msra.mxu0 %v955
    %v957 = vand.u32 %v292, 4294901760
    %v958 = vsub.f32 %v292, %v957
    %959 = vmatmul.f32.gmra.mxu0 %v958
    %v960 = vpop.f32.mrf.mxu0
    %v961 = vadd.f32 %v931, %v960
    %v962 = vand.u32 %v295, 4294901760
    %v963 = vsub.f32 %v295, %v962
    %964 = vmatmul.f32.gmra.mxu0 %v963
    %v965 = vpop.f32.mrf.mxu0
    %v966 = vadd.f32 %v935, %v965
    %967 = vdwg.mxu0
    %968 = vmatpush.msra.mxu0 0.0
    %969 = vmatpush.msra.mxu0 0.0
    %970 = vmatpush.msra.mxu0 0.0
    %971 = vmatpush.msra.mxu0 0.0
    %972 = vmatpush.msra.mxu0 0.0
    %973 = vmatpush.msra.mxu0 0.0
    %974 = vmatpush.msra.mxu0 0.0
    %975 = vmatpush.msra.mxu0 0.0
    %976 = vmatpush.msra.mxu0 0.0
    %977 = vmatpush.msra.mxu0 0.0
    %978 = vmatpush.msra.mxu0 0.0
    %979 = vmatpush.msra.mxu0 0.0
    %980 = vmatpush.msra.mxu0 0.0
    %981 = vmatpush.msra.mxu0 0.0
    %v982 = vand.u32 %v287, 4294901760
    %983 = vmatpush.msra.mxu0 %v982
    %v984 = vand.u32 %v283, 4294901760
    %985 = vmatpush.msra.mxu0 %v984
    %v986 = vand.u32 %v292, 4294901760
    %v987 = vsub.f32 %v292, %v986
    %v988 = vand.u32 %v987, 4294901760
    %989 = vmatmul.f32.gmra.mxu0 %v988
    %v990 = vpop.f32.mrf.mxu0
    %v991 = vadd.f32 %v961, %v990
    %v992 = vand.u32 %v295, 4294901760
    %v993 = vsub.f32 %v295, %v992
    %v994 = vand.u32 %v993, 4294901760
    %995 = vmatmul.f32.gmra.mxu0 %v994
    %v996 = vpop.f32.mrf.mxu0
    %v997 = vadd.f32 %v966, %v996
    %998 = vdwg.mxu0
    %999 = vmatpush.msra.mxu0 0.0
    %1000 = vmatpush.msra.mxu0 0.0
    %1001 = vmatpush.msra.mxu0 0.0
    %1002 = vmatpush.msra.mxu0 0.0
    %1003 = vmatpush.msra.mxu0 0.0
    %1004 = vmatpush.msra.mxu0 0.0
    %1005 = vmatpush.msra.mxu0 0.0
    %1006 = vmatpush.msra.mxu0 0.0
    %1007 = vmatpush.msra.mxu0 0.0
    %1008 = vmatpush.msra.mxu0 0.0
    %1009 = vmatpush.msra.mxu0 0.0
    %1010 = vmatpush.msra.mxu0 0.0
    %1011 = vmatpush.msra.mxu0 0.0
    %1012 = vmatpush.msra.mxu0 0.0
    %v1013 = vand.u32 %v287, 4294901760
    %v1014 = vsub.f32 %v287, %v1013
    %v1015 = vand.u32 %v1014, 4294901760
    %1016 = vmatpush.msra.mxu0 %v1015
    %v1017 = vand.u32 %v283, 4294901760
    %v1018 = vsub.f32 %v283, %v1017
    %v1019 = vand.u32 %v1018, 4294901760
    %1020 = vmatpush.msra.mxu0 %v1019
    %v1021 = vand.u32 %v292, 4294901760
    %1022 = vmatmul.f32.gmra.mxu0 %v1021
    %v1023 = vpop.f32.mrf.mxu0
    %v1024 = vadd.f32 %v991, %v1023
    %v1025 = vand.u32 %v295, 4294901760
    %1026 = vmatmul.f32.gmra.mxu0 %v1025
    %v1027 = vpop.f32.mrf.mxu0
    %v1028 = vadd.f32 %v997, %v1027
    %1029 = vdwg.mxu0
    %1030 = vmatpush.msra.mxu0 0.0
    %1031 = vmatpush.msra.mxu0 0.0
    %1032 = vmatpush.msra.mxu0 0.0
    %1033 = vmatpush.msra.mxu0 0.0
    %1034 = vmatpush.msra.mxu0 0.0
    %1035 = vmatpush.msra.mxu0 0.0
    %1036 = vmatpush.msra.mxu0 0.0
    %1037 = vmatpush.msra.mxu0 0.0
    %1038 = vmatpush.msra.mxu0 0.0
    %1039 = vmatpush.msra.mxu0 0.0
    %1040 = vmatpush.msra.mxu0 0.0
    %1041 = vmatpush.msra.mxu0 0.0
    %1042 = vmatpush.msra.mxu0 0.0
    %1043 = vmatpush.msra.mxu0 0.0
    %v1044 = vand.u32 %v287, 4294901760
    %1045 = vmatpush.msra.mxu0 %v1044
    %v1046 = vand.u32 %v283, 4294901760
    %1047 = vmatpush.msra.mxu0 %v1046
    %v1048 = vand.u32 %v292, 4294901760
    %1049 = vmatmul.f32.gmra.mxu0 %v1048
    %v1050 = vpop.f32.mrf.mxu0
    %v1051 = vadd.f32 %v1024, %v1050
    %v1052 = vand.u32 %v295, 4294901760
    %1053 = vmatmul.f32.gmra.mxu0 %v1052
    %v1054 = vpop.f32.mrf.mxu0
    %v1055 = vadd.f32 %v1028, %v1054
    %1056 = vdwg.mxu0
    %v1057 = vld [vmem:[%s3] sm:$0xff]
    %s1058 = scalar_lea.vmem %s3, 8
    %v1059 = vld [vmem:[%s1058] sm:$0xff]
    %1061 = vst [vmem:[#allocation1] ss:$2 sm:$0xff] %v1057
    %v1062 = vld.sshfl [vmem:[#allocation1] sm:$0xff pattern:$0x75316420]
    %v1063 = vld.sshfl [vmem:[#allocation1 + $0x8] sm:$0xff pattern:$0x75316420]
    %1067 = vst [vmem:[#allocation1] ss:$2 sm:$0xff] %v1059
    %v1068 = vld.sshfl [vmem:[#allocation1] sm:$0xff pattern:$0x75316420]
    %v1069 = vld.sshfl [vmem:[#allocation1 + $0x8] sm:$0xff pattern:$0x75316420]
    %v1072 = vld [vmem:[%s4] sm:$0xff]
    %s1073 = scalar_lea.vmem %s4, 8
    %v1074 = vld [vmem:[%s1073] sm:$0xff]
    %1076 = vst [vmem:[#allocation1] ss:$2 sm:$0xff] %v1072
    %v1077 = vld.sshfl [vmem:[#allocation1] sm:$0xff pattern:$0x75316420]
    %v1078 = vld.sshfl [vmem:[#allocation1 + $0x8] sm:$0xff pattern:$0x75316420]
    %1082 = vst [vmem:[#allocation1] ss:$2 sm:$0xff] %v1074
    %v1083 = vld.sshfl [vmem:[#allocation1] sm:$0xff pattern:$0x75316420]
    %v1084 = vld.sshfl [vmem:[#allocation1 + $0x8] sm:$0xff pattern:$0x75316420]
    %v1087 = vmul.f32 %v246, %v1062
    %v1088 = vmul.f32 %v247, %v1063
    %v1089 = vmul.f32 %v248, %v1068
    %v1090 = vmul.f32 %v249, %v1069
    %v1091 = vmul.f32 %v252, %v1077
    %v1092 = vmul.f32 %v253, %v1078
    %v1093 = vmul.f32 %v254, %v1083
    %v1094 = vmul.f32 %v255, %v1084
    %v1095 = vadd.f32 %v1087, %v1091
    %v1096 = vadd.f32 %v1088, %v1092
    %v1097 = vadd.f32 %v1089, %v1093
    %v1098 = vadd.f32 %v1090, %v1094
    %1100 = vrot.lane.b32.xlu0 %v1098, 17
    %v1101 = vpop.permute.xlu0 %1100
    %1106 = vrot.lane.b32.xlu0 %v1095, 17
    %v1107 = vpop.permute.xlu0 %1106
    %1108 = vrot.lane.b32.xlu0 %v1096, 17
    %v1109 = vpop.permute.xlu0 %1108
    %1110 = vrot.lane.b32.xlu0 %v1097, 17
    %v1111 = vpop.permute.xlu0 %1110
    %vm1112 = vcmask 138240
    %v1113 = vsel %vm1112, %v1107, %v1109
    %v1114 = vsel %vm1112, %v1109, %v1111
    %v1115 = vsel %vm1112, %v1111, %v1101
    %v1120 = vsel %vm1112, %v1101, %v1107
    %v1121 = vsel %vm117, 1, 0
    %v1122 = vsel %vm118, 1, 0
    %v1123 = vsel %vm119, 1, 0
    %v1124 = vsel %vm120, 1, 0
    %vm1125 = vcmp.eq.s32.totalorder %v1121, 1
    %vm1126 = vcmp.eq.s32.totalorder %v1122, 1
    %vm1127 = vcmp.eq.s32.totalorder %v1123, 1
    %vm1128 = vcmp.eq.s32.totalorder %v1124, 1
    %v1129 = vsel %vm1125, %v1120, 0.0
    %v1130 = vsel %vm1126, %v1113, 0.0
    %v1131 = vsel %vm1127, %v1114, 0.0
    %v1132 = vsel %vm1128, %v1115, 0.0
    %1133 = vst [vmem:[#allocation2] sm:$0xf] %v1129
    %1134 = vst [vmem:[#allocation2 + $0x8] sm:$0xf] %v1130
    %1135 = vst [vmem:[#allocation2 + $0x10] sm:$0xf] %v1131
    %1136 = vst [vmem:[#allocation2 + $0x18] sm:$0xf] %v1132
    %1137 = vrot.lane.b32.xlu0 %v1098, 16
    %v1138 = vpop.permute.xlu0 %1137
    %1140 = vrot.lane.b32.xlu0 %v1095, 16
    %v1141 = vpop.permute.xlu0 %1140
    %1142 = vrot.lane.b32.xlu0 %v1096, 16
    %v1143 = vpop.permute.xlu0 %1142
    %1144 = vrot.lane.b32.xlu0 %v1097, 16
    %v1145 = vpop.permute.xlu0 %1144
    %v1146 = vsel %vm290, %v1141, %v1143
    %v1147 = vsel %vm290, %v1143, %v1145
    %v1148 = vsel %vm290, %v1145, %v1138
    %v1153 = vsel %vm290, %v1138, %v1141
    %v1154 = vsel %vm133, 1, 0
    %v1155 = vsel %vm134, 1, 0
    %v1156 = vsel %vm135, 1, 0
    %v1157 = vsel %vm136, 1, 0
    %vm1158 = vcmp.eq.s32.totalorder %v1154, 1
    %vm1159 = vcmp.eq.s32.totalorder %v1155, 1
    %vm1160 = vcmp.eq.s32.totalorder %v1156, 1
    %vm1161 = vcmp.eq.s32.totalorder %v1157, 1
    %v1162 = vsel %vm1158, %v1153, 0.0
    %v1163 = vsel %vm1159, %v1146, 0.0
    %v1164 = vsel %vm1160, %v1147, 0.0
    %v1165 = vsel %vm1161, %v1148, 0.0
    %v1170 = vrot.slane %v1162, 4
    %v1171 = vrot.slane %v1163, 4
    %v1172 = vrot.slane %v1164, 4
    %v1173 = vrot.slane %v1165, 4
    %1178 = vst [vmem:[#allocation2] sm:$0xf0] %v1170
    %1179 = vst [vmem:[#allocation2 + $0x8] sm:$0xf0] %v1171
    %1180 = vst [vmem:[#allocation2 + $0x10] sm:$0xf0] %v1172
    %1181 = vst [vmem:[#allocation2 + $0x18] sm:$0xf0] %v1173
    %1182 = vrot.lane.b32.xlu0 %v1098, 15
    %v1183 = vpop.permute.xlu0 %1182
    %1185 = vrot.lane.b32.xlu0 %v1095, 15
    %v1186 = vpop.permute.xlu0 %1185
    %1187 = vrot.lane.b32.xlu0 %v1096, 15
    %v1188 = vpop.permute.xlu0 %1187
    %1189 = vrot.lane.b32.xlu0 %v1097, 15
    %v1190 = vpop.permute.xlu0 %1189
    %vm1191 = vcmask 121856
    %v1192 = vsel %vm1191, %v1186, %v1188
    %v1193 = vsel %vm1191, %v1188, %v1190
    %v1194 = vsel %vm1191, %v1190, %v1183
    %v1199 = vsel %vm1191, %v1183, %v1186
    %v1200 = vsel %vm149, 1, 0
    %v1201 = vsel %vm150, 1, 0
    %v1202 = vsel %vm151, 1, 0
    %v1203 = vsel %vm152, 1, 0
    %vm1204 = vcmp.eq.s32.totalorder %v1200, 1
    %vm1205 = vcmp.eq.s32.totalorder %v1201, 1
    %vm1206 = vcmp.eq.s32.totalorder %v1202, 1
    %vm1207 = vcmp.eq.s32.totalorder %v1203, 1
    %v1208 = vsel %vm1204, %v1199, 0.0
    %v1209 = vsel %vm1205, %v1192, 0.0
    %v1210 = vsel %vm1206, %v1193, 0.0
    %v1211 = vsel %vm1207, %v1194, 0.0
    %1212 = vst [vmem:[#allocation2 + $0x20] sm:$0xf] %v1208
    %1213 = vst [vmem:[#allocation2 + $0x28] sm:$0xf] %v1209
    %1214 = vst [vmem:[#allocation2 + $0x30] sm:$0xf] %v1210
    %1215 = vst [vmem:[#allocation2 + $0x38] sm:$0xf] %v1211
    %1216 = vrot.lane.b32.xlu0 %v1098, 1
    %v1217 = vpop.permute.xlu0 %1216
    %1219 = vrot.lane.b32.xlu0 %v1095, 1
    %v1220 = vpop.permute.xlu0 %1219
    %1221 = vrot.lane.b32.xlu0 %v1096, 1
    %v1222 = vpop.permute.xlu0 %1221
    %1223 = vrot.lane.b32.xlu0 %v1097, 1
    %v1224 = vpop.permute.xlu0 %1223
    %vm1225 = vcmask 7168
    %v1226 = vsel %vm1225, %v1220, %v1222
    %v1227 = vsel %vm1225, %v1222, %v1224
    %v1228 = vsel %vm1225, %v1224, %v1217
    %v1233 = vsel %vm1225, %v1217, %v1220
    %v1234 = vsel %vm169, 1, 0
    %v1235 = vsel %vm170, 1, 0
    %v1236 = vsel %vm171, 1, 0
    %v1237 = vsel %vm172, 1, 0
    %vm1238 = vcmp.eq.s32.totalorder %v1234, 1
    %vm1239 = vcmp.eq.s32.totalorder %v1235, 1
    %vm1240 = vcmp.eq.s32.totalorder %v1236, 1
    %vm1241 = vcmp.eq.s32.totalorder %v1237, 1
    %v1242 = vsel %vm1238, %v1233, 0.0
    %v1243 = vsel %vm1239, %v1226, 0.0
    %v1244 = vsel %vm1240, %v1227, 0.0
    %v1245 = vsel %vm1241, %v1228, 0.0
    %v1250 = vrot.slane %v1242, 4
    %v1251 = vrot.slane %v1243, 4
    %v1252 = vrot.slane %v1244, 4
    %v1253 = vrot.slane %v1245, 4
    %1258 = vst [vmem:[#allocation2 + $0x20] sm:$0xf0] %v1250
    %1259 = vst [vmem:[#allocation2 + $0x28] sm:$0xf0] %v1251
    %1260 = vst [vmem:[#allocation2 + $0x30] sm:$0xf0] %v1252
    %1261 = vst [vmem:[#allocation2 + $0x38] sm:$0xf0] %v1253
    %1262 = vst [vmem:[#allocation2 + $0x40] sm:$0xf] %v1095
    %1263 = vst [vmem:[#allocation2 + $0x48] sm:$0xf] %v1096
    %1264 = vst [vmem:[#allocation2 + $0x50] sm:$0xf] %v1097
    %1265 = vst [vmem:[#allocation2 + $0x58] sm:$0xf] %v1098
    %1266 = vrot.lane.b32.xlu0 %v1095, 127
    %v1267 = vpop.permute.xlu0 %1266
    %1268 = vrot.lane.b32.xlu0 %v1096, 127
    %v1269 = vpop.permute.xlu0 %1268
    %1270 = vrot.lane.b32.xlu0 %v1097, 127
    %v1271 = vpop.permute.xlu0 %1270
    %1272 = vrot.lane.b32.xlu0 %v1098, 127
    %v1273 = vpop.permute.xlu0 %1272
    %vm1274 = vcmask 1039360
    %v1275 = vsel %vm1274, %v1267, %v1269
    %v1276 = vsel %vm1274, %v1269, %v1271
    %v1277 = vsel %vm1274, %v1271, %v1273
    %v1283 = vsel %vm1274, %v1273, %v1267
    %v1284 = vsel %vm177, 1, 0
    %v1285 = vsel %vm178, 1, 0
    %v1286 = vsel %vm179, 1, 0
    %v1287 = vsel %vm180, 1, 0
    %vm1288 = vcmp.eq.s32.totalorder %v1284, 1
    %vm1289 = vcmp.eq.s32.totalorder %v1285, 1
    %vm1290 = vcmp.eq.s32.totalorder %v1286, 1
    %vm1291 = vcmp.eq.s32.totalorder %v1287, 1
    %v1292 = vsel %vm1288, %v1275, 0.0
    %v1293 = vsel %vm1289, %v1276, 0.0
    %v1294 = vsel %vm1290, %v1277, 0.0
    %v1295 = vsel %vm1291, %v1283, 0.0
    %v1300 = vrot.slane %v1292, 4
    %v1301 = vrot.slane %v1293, 4
    %v1302 = vrot.slane %v1294, 4
    %v1303 = vrot.slane %v1295, 4
    %1308 = vst [vmem:[#allocation2 + $0x40] sm:$0xf0] %v1300
    %1309 = vst [vmem:[#allocation2 + $0x48] sm:$0xf0] %v1301
    %1310 = vst [vmem:[#allocation2 + $0x50] sm:$0xf0] %v1302
    %1311 = vst [vmem:[#allocation2 + $0x58] sm:$0xf0] %v1303
    %1312 = vrot.lane.b32.xlu0 %v1095, 113
    %v1313 = vpop.permute.xlu0 %1312
    %1314 = vrot.lane.b32.xlu0 %v1096, 113
    %v1315 = vpop.permute.xlu0 %1314
    %1316 = vrot.lane.b32.xlu0 %v1097, 113
    %v1317 = vpop.permute.xlu0 %1316
    %1318 = vrot.lane.b32.xlu0 %v1098, 113
    %v1319 = vpop.permute.xlu0 %1318
    %vm1320 = vcmask 924672
    %v1321 = vsel %vm1320, %v1313, %v1315
    %v1322 = vsel %vm1320, %v1315, %v1317
    %v1323 = vsel %vm1320, %v1317, %v1319
    %v1329 = vsel %vm1320, %v1319, %v1313
    %v1330 = vsel %vm197, 1, 0
    %v1331 = vsel %vm198, 1, 0
    %v1332 = vsel %vm199, 1, 0
    %v1333 = vsel %vm200, 1, 0
    %vm1334 = vcmp.eq.s32.totalorder %v1330, 1
    %vm1335 = vcmp.eq.s32.totalorder %v1331, 1
    %vm1336 = vcmp.eq.s32.totalorder %v1332, 1
    %vm1337 = vcmp.eq.s32.totalorder %v1333, 1
    %v1338 = vsel %vm1334, %v1321, 0.0
    %v1339 = vsel %vm1335, %v1322, 0.0
    %v1340 = vsel %vm1336, %v1323, 0.0
    %v1341 = vsel %vm1337, %v1329, 0.0
    %1342 = vst [vmem:[#allocation2 + $0x60] sm:$0xf] %v1338
    %1343 = vst [vmem:[#allocation2 + $0x68] sm:$0xf] %v1339
    %1344 = vst [vmem:[#allocation2 + $0x70] sm:$0xf] %v1340
    %1345 = vst [vmem:[#allocation2 + $0x78] sm:$0xf] %v1341
    %1346 = vrot.lane.b32.xlu0 %v1095, 112
    %v1347 = vpop.permute.xlu0 %1346
    %1348 = vrot.lane.b32.xlu0 %v1096, 112
    %v1349 = vpop.permute.xlu0 %1348
    %1350 = vrot.lane.b32.xlu0 %v1097, 112
    %v1351 = vpop.permute.xlu0 %1350
    %1352 = vrot.lane.b32.xlu0 %v1098, 112
    %v1353 = vpop.permute.xlu0 %1352
    %vm1354 = vcmask 916480
    %v1355 = vsel %vm1354, %v1347, %v1349
    %v1356 = vsel %vm1354, %v1349, %v1351
    %v1357 = vsel %vm1354, %v1351, %v1353
    %v1363 = vsel %vm1354, %v1353, %v1347
    %v1364 = vsel %vm205, 1, 0
    %v1365 = vsel %vm206, 1, 0
    %v1366 = vsel %vm207, 1, 0
    %v1367 = vsel %vm208, 1, 0
    %vm1368 = vcmp.eq.s32.totalorder %v1364, 1
    %vm1369 = vcmp.eq.s32.totalorder %v1365, 1
    %vm1370 = vcmp.eq.s32.totalorder %v1366, 1
    %vm1371 = vcmp.eq.s32.totalorder %v1367, 1
    %v1372 = vsel %vm1368, %v1355, 0.0
    %v1373 = vsel %vm1369, %v1356, 0.0
    %v1374 = vsel %vm1370, %v1357, 0.0
    %v1375 = vsel %vm1371, %v1363, 0.0
    %v1380 = vrot.slane %v1372, 4
    %v1381 = vrot.slane %v1373, 4
    %v1382 = vrot.slane %v1374, 4
    %v1383 = vrot.slane %v1375, 4
    %1388 = vst [vmem:[#allocation2 + $0x60] sm:$0xf0] %v1380
    %1389 = vst [vmem:[#allocation2 + $0x68] sm:$0xf0] %v1381
    %1390 = vst [vmem:[#allocation2 + $0x70] sm:$0xf0] %v1382
    %1391 = vst [vmem:[#allocation2 + $0x78] sm:$0xf0] %v1383
    %1392 = vrot.lane.b32.xlu0 %v1095, 111
    %v1393 = vpop.permute.xlu0 %1392
    %1394 = vrot.lane.b32.xlu0 %v1096, 111
    %v1395 = vpop.permute.xlu0 %1394
    %1396 = vrot.lane.b32.xlu0 %v1097, 111
    %v1397 = vpop.permute.xlu0 %1396
    %1398 = vrot.lane.b32.xlu0 %v1098, 111
    %v1399 = vpop.permute.xlu0 %1398
    %vm1400 = vcmask 908288
    %v1401 = vsel %vm1400, %v1393, %v1395
    %v1402 = vsel %vm1400, %v1395, %v1397
    %v1403 = vsel %vm1400, %v1397, %v1399
    %v1409 = vsel %vm1400, %v1399, %v1393
    %v1410 = vsel %vm213, 1, 0
    %v1411 = vsel %vm214, 1, 0
    %v1412 = vsel %vm215, 1, 0
    %v1413 = vsel %vm216, 1, 0
    %vm1414 = vcmp.eq.s32.totalorder %v1410, 1
    %vm1415 = vcmp.eq.s32.totalorder %v1411, 1
    %vm1416 = vcmp.eq.s32.totalorder %v1412, 1
    %vm1417 = vcmp.eq.s32.totalorder %v1413, 1
    %v1418 = vsel %vm1414, %v1401, 0.0
    %v1419 = vsel %vm1415, %v1402, 0.0
    %v1420 = vsel %vm1416, %v1403, 0.0
    %v1421 = vsel %vm1417, %v1409, 0.0
    %1422 = vst [vmem:[#allocation2 + $0x80] sm:$0xf] %v1418
    %1423 = vst [vmem:[#allocation2 + $0x88] sm:$0xf] %v1419
    %1424 = vst [vmem:[#allocation2 + $0x90] sm:$0xf] %v1420
    %1425 = vst [vmem:[#allocation2 + $0x98] sm:$0xf] %v1421
    %v1426 = vld [vmem:[%s5] sm:$0xff]
    %v1427 = vld [vmem:[%s5 + $0x8] sm:$0xff]
    %v1428 = vld [vmem:[#allocation2] sm:$0xff]
    %v1429 = vld [vmem:[#allocation2 + $0x8] sm:$0xff]
    %v1430 = vld [vmem:[#allocation2 + $0x10] sm:$0xff]
    %v1431 = vld [vmem:[#allocation2 + $0x18] sm:$0xff]
    %v1432 = vld [vmem:[#allocation2 + $0x20] sm:$0xff]
    %v1433 = vld [vmem:[#allocation2 + $0x28] sm:$0xff]
    %v1434 = vld [vmem:[#allocation2 + $0x30] sm:$0xff]
    %v1435 = vld [vmem:[#allocation2 + $0x38] sm:$0xff]
    %v1436 = vld [vmem:[#allocation2 + $0x40] sm:$0xff]
    %v1437 = vld [vmem:[#allocation2 + $0x48] sm:$0xff]
    %v1438 = vld [vmem:[#allocation2 + $0x50] sm:$0xff]
    %v1439 = vld [vmem:[#allocation2 + $0x58] sm:$0xff]
    %v1440 = vld [vmem:[#allocation2 + $0x60] sm:$0xff]
    %v1441 = vld [vmem:[#allocation2 + $0x68] sm:$0xff]
    %v1442 = vld [vmem:[#allocation2 + $0x70] sm:$0xff]
    %v1443 = vld [vmem:[#allocation2 + $0x78] sm:$0xff]
    %v1444 = vld [vmem:[#allocation2 + $0x80] sm:$0xf]
    %v1445 = vld [vmem:[#allocation2 + $0x88] sm:$0xf]
    %v1446 = vld [vmem:[#allocation2 + $0x90] sm:$0xf]
    %v1447 = vld [vmem:[#allocation2 + $0x98] sm:$0xf]
    %v1448 = vld [vmem:[%s6] sm:$0xff]
    %v1449 = vld [vmem:[%s6 + $0x8] sm:$0xff]
    %1451 = vset.pattern.permute.xlu0 0
    %1452 = vperm.xlu0 %1451, %v1448
    %v1453 = vpop.permute.xlu0 %1452
    %1456 = vset.pattern.permute.xlu0 0
    %1457 = vperm.xlu0 %1456, %v1449
    %v1458 = vpop.permute.xlu0 %1457
    %vm1460 = vcmask 293888
    %v1462 = vsel %vm1460, %v1426, 0
    %v1465 = vsel %vm1460, %v1427, 0
    %vm1467 = vcmask 1043456
    %v1469 = vsel %vm1467, %v1444, 0
    %v1472 = vsel %vm1467, %v1445, 0
    %v1475 = vsel %vm1467, %v1446, 0
    %v1478 = vsel %vm1467, %v1447, 0
    %1480 = vmatpush.msra.mxu0 0.0
    %1481 = vmatpush.msra.mxu0 0.0
    %1482 = vmatpush.msra.mxu0 0.0
    %1483 = vmatpush.msra.mxu0 0.0
    %1484 = vmatpush.msra.mxu0 0.0
    %1485 = vmatpush.msra.mxu0 0.0
    %1486 = vmatpush.msra.mxu0 0.0
    %1487 = vmatpush.msra.mxu0 0.0
    %1488 = vmatpush.msra.mxu0 0.0
    %1489 = vmatpush.msra.mxu0 0.0
    %1490 = vmatpush.msra.mxu0 0.0
    %1491 = vmatpush.msra.mxu0 %v1469
    %1492 = vmatpush.msra.mxu0 %v1440
    %1493 = vmatpush.msra.mxu0 %v1436
    %1494 = vmatpush.msra.mxu0 %v1432
    %1495 = vmatpush.msra.mxu0 %v1428
    %1496 = vmatmul.f32.gmra.mxu0 %v1462
    %v1497 = vpop.f32.mrf.mxu0
    %v1498 = vadd.f32 %v1453, %v1497
    %1499 = vmatmul.f32.gmra.mxu0 %v1465
    %v1500 = vpop.f32.mrf.mxu0
    %v1501 = vadd.f32 %v1458, %v1500
    %1502 = vdwg.mxu0
    %1503 = vmatpush.msra.mxu0 0.0
    %1504 = vmatpush.msra.mxu0 0.0
    %1505 = vmatpush.msra.mxu0 0.0
    %1506 = vmatpush.msra.mxu0 0.0
    %1507 = vmatpush.msra.mxu0 0.0
    %1508 = vmatpush.msra.mxu0 0.0
    %1509 = vmatpush.msra.mxu0 0.0
    %1510 = vmatpush.msra.mxu0 0.0
    %1511 = vmatpush.msra.mxu0 0.0
    %1512 = vmatpush.msra.mxu0 0.0
    %1513 = vmatpush.msra.mxu0 0.0
    %1514 = vmatpush.msra.mxu0 %v1472
    %1515 = vmatpush.msra.mxu0 %v1441
    %1516 = vmatpush.msra.mxu0 %v1437
    %1517 = vmatpush.msra.mxu0 %v1433
    %1518 = vmatpush.msra.mxu0 %v1429
    %1519 = vmatmul.f32.gmra.mxu0 %v1462
    %v1520 = vpop.f32.mrf.mxu0
    %v1521 = vadd.f32 %v1453, %v1520
    %1522 = vmatmul.f32.gmra.mxu0 %v1465
    %v1523 = vpop.f32.mrf.mxu0
    %v1524 = vadd.f32 %v1458, %v1523
    %1525 = vdwg.mxu0
    %1526 = vmatpush.msra.mxu0 0.0
    %1527 = vmatpush.msra.mxu0 0.0
    %1528 = vmatpush.msra.mxu0 0.0
    %1529 = vmatpush.msra.mxu0 0.0
    %1530 = vmatpush.msra.mxu0 0.0
    %1531 = vmatpush.msra.mxu0 0.0
    %1532 = vmatpush.msra.mxu0 0.0
    %1533 = vmatpush.msra.mxu0 0.0
    %1534 = vmatpush.msra.mxu0 0.0
    %1535 = vmatpush.msra.mxu0 0.0
    %1536 = vmatpush.msra.mxu0 0.0
    %1537 = vmatpush.msra.mxu0 %v1475
    %1538 = vmatpush.msra.mxu0 %v1442
    %1539 = vmatpush.msra.mxu0 %v1438
    %1540 = vmatpush.msra.mxu0 %v1434
    %1541 = vmatpush.msra.mxu0 %v1430
    %1542 = vmatmul.f32.gmra.mxu0 %v1462
    %v1543 = vpop.f32.mrf.mxu0
    %v1544 = vadd.f32 %v1453, %v1543
    %1545 = vmatmul.f32.gmra.mxu0 %v1465
    %v1546 = vpop.f32.mrf.mxu0
    %v1547 = vadd.f32 %v1458, %v1546
    %1548 = vdwg.mxu0
    %1549 = vmatpush.msra.mxu0 0.0
    %1550 = vmatpush.msra.mxu0 0.0
    %1551 = vmatpush.msra.mxu0 0.0
    %1552 = vmatpush.msra.mxu0 0.0
    %1553 = vmatpush.msra.mxu0 0.0
    %1554 = vmatpush.msra.mxu0 0.0
    %1555 = vmatpush.msra.mxu0 0.0
    %1556 = vmatpush.msra.mxu0 0.0
    %1557 = vmatpush.msra.mxu0 0.0
    %1558 = vmatpush.msra.mxu0 0.0
    %1559 = vmatpush.msra.mxu0 0.0
    %1560 = vmatpush.msra.mxu0 %v1478
    %1561 = vmatpush.msra.mxu0 %v1443
    %1562 = vmatpush.msra.mxu0 %v1439
    %1563 = vmatpush.msra.mxu0 %v1435
    %1564 = vmatpush.msra.mxu0 %v1431
    %1565 = vmatmul.f32.gmra.mxu0 %v1462
    %v1566 = vpop.f32.mrf.mxu0
    %v1567 = vadd.f32 %v1453, %v1566
    %1568 = vmatmul.f32.gmra.mxu0 %v1465
    %v1569 = vpop.f32.mrf.mxu0
    %v1570 = vadd.f32 %v1458, %v1569
    %1571 = vdwg.mxu0
    %v1572 = vadd.f32 %v1498, %v481
    %v1573 = vadd.f32 %v1521, %v671
    %v1574 = vadd.f32 %v1544, %v861
    %v1575 = vadd.f32 %v1567, %v1051
    %v1576 = vadd.f32 %v1501, %v485
    %v1577 = vadd.f32 %v1524, %v675
    %v1578 = vadd.f32 %v1547, %v865
    %v1579 = vadd.f32 %v1570, %v1055
    %v1580 = vxor.u32 %v1572, 2147483648
    %v1581 = vxor.u32 %v1573, 2147483648
    %v1582 = vxor.u32 %v1574, 2147483648
    %v1583 = vxor.u32 %v1575, 2147483648
    %v1584 = vxor.u32 %v1576, 2147483648
    %v1585 = vxor.u32 %v1577, 2147483648
    %v1586 = vxor.u32 %v1578, 2147483648
    %v1587 = vxor.u32 %v1579, 2147483648
    %v1588 = vmul.f32 %v1580, 1.442695
    %v1589 = vpow.pop %v1588
    %v1590 = vmul.f32 %v1581, 1.442695
    %v1591 = vpow.pop %v1590
    %v1592 = vmul.f32 %v1582, 1.442695
    %v1593 = vpow.pop %v1592
    %v1594 = vmul.f32 %v1583, 1.442695
    %v1595 = vpow.pop %v1594
    %v1596 = vmul.f32 %v1584, 1.442695
    %v1597 = vpow.pop %v1596
    %v1598 = vmul.f32 %v1585, 1.442695
    %v1599 = vpow.pop %v1598
    %v1600 = vmul.f32 %v1586, 1.442695
    %v1601 = vpow.pop %v1600
    %v1602 = vmul.f32 %v1587, 1.442695
    %v1603 = vpow.pop %v1602
    %v1604 = vadd.f32 %v1589, 1.0
    %v1605 = vadd.f32 %v1591, 1.0
    %v1606 = vadd.f32 %v1593, 1.0
    %v1607 = vadd.f32 %v1595, 1.0
    %v1608 = vadd.f32 %v1597, 1.0
    %v1609 = vadd.f32 %v1599, 1.0
    %v1610 = vadd.f32 %v1601, 1.0
    %v1611 = vadd.f32 %v1603, 1.0
    %v1612 = vrcp.pop %v1604
    %v1613 = vmul.f32 %v1604, %v1612
    %v1614 = vsub.f32 1.0, %v1613
    %v1615 = vmul.f32 %v1612, %v1614
    %v1616 = vadd.f32 %v1612, %v1615
    %vm1617 = vweird.f32 %v1604
    %vm1618 = vweird.f32 %v1612
    %vm1619 = vmor %vm1617, %vm1618
    %v1620 = vsel %vm1619, %v1612, %v1616
    %v1621 = vand.u32 2147483647, %v1604
    %vm1622 = vcmp.eq.f32.partialorder %v1621, 8.507059e+37
    %v1623 = vand.u32 %v1604, 2147483648
    %v1624 = vor.u32 1.1754944e-38, %v1623
    %v1625 = vsel %vm1622, %v1624, %v1620
    %v1626 = vmul.f32 1.0, %v1625
    %v1627 = vrcp.pop %v1605
    %v1628 = vmul.f32 %v1605, %v1627
    %v1629 = vsub.f32 1.0, %v1628
    %v1630 = vmul.f32 %v1627, %v1629
    %v1631 = vadd.f32 %v1627, %v1630
    %vm1632 = vweird.f32 %v1605
    %vm1633 = vweird.f32 %v1627
    %vm1634 = vmor %vm1632, %vm1633
    %v1635 = vsel %vm1634, %v1627, %v1631
    %v1636 = vand.u32 2147483647, %v1605
    %vm1637 = vcmp.eq.f32.partialorder %v1636, 8.507059e+37
    %v1638 = vand.u32 %v1605, 2147483648
    %v1639 = vor.u32 1.1754944e-38, %v1638
    %v1640 = vsel %vm1637, %v1639, %v1635
    %v1641 = vmul.f32 1.0, %v1640
    %v1642 = vrcp.pop %v1606
    %v1643 = vmul.f32 %v1606, %v1642
    %v1644 = vsub.f32 1.0, %v1643
    %v1645 = vmul.f32 %v1642, %v1644
    %v1646 = vadd.f32 %v1642, %v1645
    %vm1647 = vweird.f32 %v1606
    %vm1648 = vweird.f32 %v1642
    %vm1649 = vmor %vm1647, %vm1648
    %v1650 = vsel %vm1649, %v1642, %v1646
    %v1651 = vand.u32 2147483647, %v1606
    %vm1652 = vcmp.eq.f32.partialorder %v1651, 8.507059e+37
    %v1653 = vand.u32 %v1606, 2147483648
    %v1654 = vor.u32 1.1754944e-38, %v1653
    %v1655 = vsel %vm1652, %v1654, %v1650
    %v1656 = vmul.f32 1.0, %v1655
    %v1657 = vrcp.pop %v1607
    %v1658 = vmul.f32 %v1607, %v1657
    %v1659 = vsub.f32 1.0, %v1658
    %v1660 = vmul.f32 %v1657, %v1659
    %v1661 = vadd.f32 %v1657, %v1660
    %vm1662 = vweird.f32 %v1607
    %vm1663 = vweird.f32 %v1657
    %vm1664 = vmor %vm1662, %vm1663
    %v1665 = vsel %vm1664, %v1657, %v1661
    %v1666 = vand.u32 2147483647, %v1607
    %vm1667 = vcmp.eq.f32.partialorder %v1666, 8.507059e+37
    %v1668 = vand.u32 %v1607, 2147483648
    %v1669 = vor.u32 1.1754944e-38, %v1668
    %v1670 = vsel %vm1667, %v1669, %v1665
    %v1671 = vmul.f32 1.0, %v1670
    %v1672 = vrcp.pop %v1608
    %v1673 = vmul.f32 %v1608, %v1672
    %v1674 = vsub.f32 1.0, %v1673
    %v1675 = vmul.f32 %v1672, %v1674
    %v1676 = vadd.f32 %v1672, %v1675
    %vm1677 = vweird.f32 %v1608
    %vm1678 = vweird.f32 %v1672
    %vm1679 = vmor %vm1677, %vm1678
    %v1680 = vsel %vm1679, %v1672, %v1676
    %v1681 = vand.u32 2147483647, %v1608
    %vm1682 = vcmp.eq.f32.partialorder %v1681, 8.507059e+37
    %v1683 = vand.u32 %v1608, 2147483648
    %v1684 = vor.u32 1.1754944e-38, %v1683
    %v1685 = vsel %vm1682, %v1684, %v1680
    %v1686 = vmul.f32 1.0, %v1685
    %v1687 = vrcp.pop %v1609
    %v1688 = vmul.f32 %v1609, %v1687
    %v1689 = vsub.f32 1.0, %v1688
    %v1690 = vmul.f32 %v1687, %v1689
    %v1691 = vadd.f32 %v1687, %v1690
    %vm1692 = vweird.f32 %v1609
    %vm1693 = vweird.f32 %v1687
    %vm1694 = vmor %vm1692, %vm1693
    %v1695 = vsel %vm1694, %v1687, %v1691
    %v1696 = vand.u32 2147483647, %v1609
    %vm1697 = vcmp.eq.f32.partialorder %v1696, 8.507059e+37
    %v1698 = vand.u32 %v1609, 2147483648
    %v1699 = vor.u32 1.1754944e-38, %v1698
    %v1700 = vsel %vm1697, %v1699, %v1695
    %v1701 = vmul.f32 1.0, %v1700
    %v1702 = vrcp.pop %v1610
    %v1703 = vmul.f32 %v1610, %v1702
    %v1704 = vsub.f32 1.0, %v1703
    %v1705 = vmul.f32 %v1702, %v1704
    %v1706 = vadd.f32 %v1702, %v1705
    %vm1707 = vweird.f32 %v1610
    %vm1708 = vweird.f32 %v1702
    %vm1709 = vmor %vm1707, %vm1708
    %v1710 = vsel %vm1709, %v1702, %v1706
    %v1711 = vand.u32 2147483647, %v1610
    %vm1712 = vcmp.eq.f32.partialorder %v1711, 8.507059e+37
    %v1713 = vand.u32 %v1610, 2147483648
    %v1714 = vor.u32 1.1754944e-38, %v1713
    %v1715 = vsel %vm1712, %v1714, %v1710
    %v1716 = vmul.f32 1.0, %v1715
    %v1717 = vrcp.pop %v1611
    %v1718 = vmul.f32 %v1611, %v1717
    %v1719 = vsub.f32 1.0, %v1718
    %v1720 = vmul.f32 %v1717, %v1719
    %v1721 = vadd.f32 %v1717, %v1720
    %vm1722 = vweird.f32 %v1611
    %vm1723 = vweird.f32 %v1717
    %vm1724 = vmor %vm1722, %vm1723
    %v1725 = vsel %vm1724, %v1717, %v1721
    %v1726 = vand.u32 2147483647, %v1611
    %vm1727 = vcmp.eq.f32.partialorder %v1726, 8.507059e+37
    %v1728 = vand.u32 %v1611, 2147483648
    %v1729 = vor.u32 1.1754944e-38, %v1728
    %v1730 = vsel %vm1727, %v1729, %v1725
    %v1731 = vmul.f32 1.0, %v1730
    %v1732 = vmul.f32 %v1572, %v1626
    %v1733 = vmul.f32 %v1573, %v1641
    %v1734 = vmul.f32 %v1574, %v1656
    %v1735 = vmul.f32 %v1575, %v1671
    %v1736 = vmul.f32 %v1576, %v1686
    %v1737 = vmul.f32 %v1577, %v1701
    %v1738 = vmul.f32 %v1578, %v1716
    %v1739 = vmul.f32 %v1579, %v1731
    %1742 = vrot.lane.b32.xlu0 %v1735, 17
    %v1743 = vpop.permute.xlu0 %1742
    %1744 = vrot.lane.b32.xlu0 %v1739, 17
    %v1745 = vpop.permute.xlu0 %1744
    %1754 = vrot.lane.b32.xlu0 %v1732, 17
    %v1755 = vpop.permute.xlu0 %1754
    %1756 = vrot.lane.b32.xlu0 %v1733, 17
    %v1757 = vpop.permute.xlu0 %1756
    %1758 = vrot.lane.b32.xlu0 %v1734, 17
    %v1759 = vpop.permute.xlu0 %1758
    %1760 = vrot.lane.b32.xlu0 %v1736, 17
    %v1761 = vpop.permute.xlu0 %1760
    %1762 = vrot.lane.b32.xlu0 %v1737, 17
    %v1763 = vpop.permute.xlu0 %1762
    %1764 = vrot.lane.b32.xlu0 %v1738, 17
    %v1765 = vpop.permute.xlu0 %1764
    %v1766 = vsel %vm1112, %v1755, %v1757
    %v1767 = vsel %vm1112, %v1757, %v1759
    %v1768 = vsel %vm1112, %v1759, %v1743
    %v1769 = vsel %vm1112, %v1761, %v1763
    %v1770 = vsel %vm1112, %v1763, %v1765
    %v1771 = vsel %vm1112, %v1765, %v1745
    %v1780 = vsel %vm1112, %v1743, %v1755
    %v1781 = vsel %vm1112, %v1745, %v1761
    %v1782 = vsel %vm1125, %v1780, 0.0
    %v1783 = vsel %vm1126, %v1766, 0.0
    %v1784 = vsel %vm1127, %v1767, 0.0
    %v1785 = vsel %vm1128, %v1768, 0.0
    %v1786 = vsel %vm1125, %v1781, 0.0
    %v1787 = vsel %vm1126, %v1769, 0.0
    %v1788 = vsel %vm1127, %v1770, 0.0
    %v1789 = vsel %vm1128, %v1771, 0.0
    %1790 = vst [vmem:[#allocation3] sm:$0xff] %v1782
    %1791 = vst [vmem:[#allocation3 + $0x8] sm:$0xff] %v1783
    %1792 = vst [vmem:[#allocation3 + $0x10] sm:$0xff] %v1784
    %1793 = vst [vmem:[#allocation3 + $0x18] sm:$0xff] %v1785
    %1794 = vst [vmem:[#allocation3 + $0x20] sm:$0xff] %v1786
    %1795 = vst [vmem:[#allocation3 + $0x28] sm:$0xff] %v1787
    %1796 = vst [vmem:[#allocation3 + $0x30] sm:$0xff] %v1788
    %1797 = vst [vmem:[#allocation3 + $0x38] sm:$0xff] %v1789
    %1798 = vrot.lane.b32.xlu0 %v1735, 16
    %v1799 = vpop.permute.xlu0 %1798
    %1800 = vrot.lane.b32.xlu0 %v1739, 16
    %v1801 = vpop.permute.xlu0 %1800
    %1804 = vrot.lane.b32.xlu0 %v1732, 16
    %v1805 = vpop.permute.xlu0 %1804
    %1806 = vrot.lane.b32.xlu0 %v1733, 16
    %v1807 = vpop.permute.xlu0 %1806
    %1808 = vrot.lane.b32.xlu0 %v1734, 16
    %v1809 = vpop.permute.xlu0 %1808
    %1810 = vrot.lane.b32.xlu0 %v1736, 16
    %v1811 = vpop.permute.xlu0 %1810
    %1812 = vrot.lane.b32.xlu0 %v1737, 16
    %v1813 = vpop.permute.xlu0 %1812
    %1814 = vrot.lane.b32.xlu0 %v1738, 16
    %v1815 = vpop.permute.xlu0 %1814
    %v1816 = vsel %vm290, %v1805, %v1807
    %v1817 = vsel %vm290, %v1807, %v1809
    %v1818 = vsel %vm290, %v1809, %v1799
    %v1819 = vsel %vm290, %v1811, %v1813
    %v1820 = vsel %vm290, %v1813, %v1815
    %v1821 = vsel %vm290, %v1815, %v1801
    %v1830 = vsel %vm290, %v1799, %v1805
    %v1831 = vsel %vm290, %v1801, %v1811
    %v1832 = vsel %vm1158, %v1830, 0.0
    %v1833 = vsel %vm1159, %v1816, 0.0
    %v1834 = vsel %vm1160, %v1817, 0.0
    %v1835 = vsel %vm1161, %v1818, 0.0
    %v1836 = vsel %vm1158, %v1831, 0.0
    %v1837 = vsel %vm1159, %v1819, 0.0
    %v1838 = vsel %vm1160, %v1820, 0.0
    %v1839 = vsel %vm1161, %v1821, 0.0
    %1840 = vst [vmem:[#allocation3 + $0x40] sm:$0xff] %v1832
    %1841 = vst [vmem:[#allocation3 + $0x48] sm:$0xff] %v1833
    %1842 = vst [vmem:[#allocation3 + $0x50] sm:$0xff] %v1834
    %1843 = vst [vmem:[#allocation3 + $0x58] sm:$0xff] %v1835
    %1844 = vst [vmem:[#allocation3 + $0x60] sm:$0xff] %v1836
    %1845 = vst [vmem:[#allocation3 + $0x68] sm:$0xff] %v1837
    %1846 = vst [vmem:[#allocation3 + $0x70] sm:$0xff] %v1838
    %1847 = vst [vmem:[#allocation3 + $0x78] sm:$0xff] %v1839
    %1848 = vrot.lane.b32.xlu0 %v1735, 15
    %v1849 = vpop.permute.xlu0 %1848
    %1850 = vrot.lane.b32.xlu0 %v1739, 15
    %v1851 = vpop.permute.xlu0 %1850
    %1854 = vrot.lane.b32.xlu0 %v1732, 15
    %v1855 = vpop.permute.xlu0 %1854
    %1856 = vrot.lane.b32.xlu0 %v1733, 15
    %v1857 = vpop.permute.xlu0 %1856
    %1858 = vrot.lane.b32.xlu0 %v1734, 15
    %v1859 = vpop.permute.xlu0 %1858
    %1860 = vrot.lane.b32.xlu0 %v1736, 15
    %v1861 = vpop.permute.xlu0 %1860
    %1862 = vrot.lane.b32.xlu0 %v1737, 15
    %v1863 = vpop.permute.xlu0 %1862
    %1864 = vrot.lane.b32.xlu0 %v1738, 15
    %v1865 = vpop.permute.xlu0 %1864
    %v1866 = vsel %vm1191, %v1855, %v1857
    %v1867 = vsel %vm1191, %v1857, %v1859
    %v1868 = vsel %vm1191, %v1859, %v1849
    %v1869 = vsel %vm1191, %v1861, %v1863
    %v1870 = vsel %vm1191, %v1863, %v1865
    %v1871 = vsel %vm1191, %v1865, %v1851
    %v1880 = vsel %vm1191, %v1849, %v1855
    %v1881 = vsel %vm1191, %v1851, %v1861
    %v1882 = vsel %vm1204, %v1880, 0.0
    %v1883 = vsel %vm1205, %v1866, 0.0
    %v1884 = vsel %vm1206, %v1867, 0.0
    %v1885 = vsel %vm1207, %v1868, 0.0
    %v1886 = vsel %vm1204, %v1881, 0.0
    %v1887 = vsel %vm1205, %v1869, 0.0
    %v1888 = vsel %vm1206, %v1870, 0.0
    %v1889 = vsel %vm1207, %v1871, 0.0
    %1890 = vst [vmem:[#allocation3 + $0x80] sm:$0xff] %v1882
    %1891 = vst [vmem:[#allocation3 + $0x88] sm:$0xff] %v1883
    %1892 = vst [vmem:[#allocation3 + $0x90] sm:$0xff] %v1884
    %1893 = vst [vmem:[#allocation3 + $0x98] sm:$0xff] %v1885
    %1894 = vst [vmem:[#allocation3 + $0xa0] sm:$0xff] %v1886
    %1895 = vst [vmem:[#allocation3 + $0xa8] sm:$0xff] %v1887
    %1896 = vst [vmem:[#allocation3 + $0xb0] sm:$0xff] %v1888
    %1897 = vst [vmem:[#allocation3 + $0xb8] sm:$0xff] %v1889
    %1898 = vrot.lane.b32.xlu0 %v1735, 1
    %v1899 = vpop.permute.xlu0 %1898
    %1900 = vrot.lane.b32.xlu0 %v1739, 1
    %v1901 = vpop.permute.xlu0 %1900
    %1904 = vrot.lane.b32.xlu0 %v1732, 1
    %v1905 = vpop.permute.xlu0 %1904
    %1906 = vrot.lane.b32.xlu0 %v1733, 1
    %v1907 = vpop.permute.xlu0 %1906
    %1908 = vrot.lane.b32.xlu0 %v1734, 1
    %v1909 = vpop.permute.xlu0 %1908
    %1910 = vrot.lane.b32.xlu0 %v1736, 1
    %v1911 = vpop.permute.xlu0 %1910
    %1912 = vrot.lane.b32.xlu0 %v1737, 1
    %v1913 = vpop.permute.xlu0 %1912
    %1914 = vrot.lane.b32.xlu0 %v1738, 1
    %v1915 = vpop.permute.xlu0 %1914
    %v1916 = vsel %vm1225, %v1905, %v1907
    %v1917 = vsel %vm1225, %v1907, %v1909
    %v1918 = vsel %vm1225, %v1909, %v1899
    %v1919 = vsel %vm1225, %v1911, %v1913
    %v1920 = vsel %vm1225, %v1913, %v1915
    %v1921 = vsel %vm1225, %v1915, %v1901
    %v1930 = vsel %vm1225, %v1899, %v1905
    %v1931 = vsel %vm1225, %v1901, %v1911
    %v1932 = vsel %vm1238, %v1930, 0.0
    %v1933 = vsel %vm1239, %v1916, 0.0
    %v1934 = vsel %vm1240, %v1917, 0.0
    %v1935 = vsel %vm1241, %v1918, 0.0
    %v1936 = vsel %vm1238, %v1931, 0.0
    %v1937 = vsel %vm1239, %v1919, 0.0
    %v1938 = vsel %vm1240, %v1920, 0.0
    %v1939 = vsel %vm1241, %v1921, 0.0
    %1940 = vst [vmem:[#allocation3 + $0xc0] sm:$0xff] %v1932
    %1941 = vst [vmem:[#allocation3 + $0xc8] sm:$0xff] %v1933
    %1942 = vst [vmem:[#allocation3 + $0xd0] sm:$0xff] %v1934
    %1943 = vst [vmem:[#allocation3 + $0xd8] sm:$0xff] %v1935
    %1944 = vst [vmem:[#allocation3 + $0xe0] sm:$0xff] %v1936
    %1945 = vst [vmem:[#allocation3 + $0xe8] sm:$0xff] %v1937
    %1946 = vst [vmem:[#allocation3 + $0xf0] sm:$0xff] %v1938
    %1947 = vst [vmem:[#allocation3 + $0xf8] sm:$0xff] %v1939
    %1948 = vst [vmem:[#allocation3 + $0x100] sm:$0xff] %v1732
    %1949 = vst [vmem:[#allocation3 + $0x108] sm:$0xff] %v1733
    %1950 = vst [vmem:[#allocation3 + $0x110] sm:$0xff] %v1734
    %1951 = vst [vmem:[#allocation3 + $0x118] sm:$0xff] %v1735
    %1952 = vst [vmem:[#allocation3 + $0x120] sm:$0xff] %v1736
    %1953 = vst [vmem:[#allocation3 + $0x128] sm:$0xff] %v1737
    %1954 = vst [vmem:[#allocation3 + $0x130] sm:$0xff] %v1738
    %1955 = vst [vmem:[#allocation3 + $0x138] sm:$0xff] %v1739
    %1956 = vrot.lane.b32.xlu0 %v1732, 127
    %v1957 = vpop.permute.xlu0 %1956
    %1958 = vrot.lane.b32.xlu0 %v1733, 127
    %v1959 = vpop.permute.xlu0 %1958
    %1960 = vrot.lane.b32.xlu0 %v1734, 127
    %v1961 = vpop.permute.xlu0 %1960
    %1962 = vrot.lane.b32.xlu0 %v1735, 127
    %v1963 = vpop.permute.xlu0 %1962
    %1964 = vrot.lane.b32.xlu0 %v1736, 127
    %v1965 = vpop.permute.xlu0 %1964
    %1966 = vrot.lane.b32.xlu0 %v1737, 127
    %v1967 = vpop.permute.xlu0 %1966
    %1968 = vrot.lane.b32.xlu0 %v1738, 127
    %v1969 = vpop.permute.xlu0 %1968
    %1970 = vrot.lane.b32.xlu0 %v1739, 127
    %v1971 = vpop.permute.xlu0 %1970
    %v1972 = vsel %vm1274, %v1957, %v1959
    %v1973 = vsel %vm1274, %v1959, %v1961
    %v1974 = vsel %vm1274, %v1961, %v1963
    %v1975 = vsel %vm1274, %v1965, %v1967
    %v1976 = vsel %vm1274, %v1967, %v1969
    %v1977 = vsel %vm1274, %v1969, %v1971
    %v1988 = vsel %vm1274, %v1963, %v1957
    %v1989 = vsel %vm1274, %v1971, %v1965
    %v1990 = vsel %vm1288, %v1972, 0.0
    %v1991 = vsel %vm1289, %v1973, 0.0
    %v1992 = vsel %vm1290, %v1974, 0.0
    %v1993 = vsel %vm1291, %v1988, 0.0
    %v1994 = vsel %vm1288, %v1975, 0.0
    %v1995 = vsel %vm1289, %v1976, 0.0
    %v1996 = vsel %vm1290, %v1977, 0.0
    %v1997 = vsel %vm1291, %v1989, 0.0
    %1998 = vst [vmem:[#allocation3 + $0x140] sm:$0xff] %v1990
    %1999 = vst [vmem:[#allocation3 + $0x148] sm:$0xff] %v1991
    %2000 = vst [vmem:[#allocation3 + $0x150] sm:$0xff] %v1992
    %2001 = vst [vmem:[#allocation3 + $0x158] sm:$0xff] %v1993
    %2002 = vst [vmem:[#allocation3 + $0x160] sm:$0xff] %v1994
    %2003 = vst [vmem:[#allocation3 + $0x168] sm:$0xff] %v1995
    %2004 = vst [vmem:[#allocation3 + $0x170] sm:$0xff] %v1996
    %2005 = vst [vmem:[#allocation3 + $0x178] sm:$0xff] %v1997
    %2006 = vrot.lane.b32.xlu0 %v1732, 113
    %v2007 = vpop.permute.xlu0 %2006
    %2008 = vrot.lane.b32.xlu0 %v1733, 113
    %v2009 = vpop.permute.xlu0 %2008
    %2010 = vrot.lane.b32.xlu0 %v1734, 113
    %v2011 = vpop.permute.xlu0 %2010
    %2012 = vrot.lane.b32.xlu0 %v1735, 113
    %v2013 = vpop.permute.xlu0 %2012
    %2014 = vrot.lane.b32.xlu0 %v1736, 113
    %v2015 = vpop.permute.xlu0 %2014
    %2016 = vrot.lane.b32.xlu0 %v1737, 113
    %v2017 = vpop.permute.xlu0 %2016
    %2018 = vrot.lane.b32.xlu0 %v1738, 113
    %v2019 = vpop.permute.xlu0 %2018
    %2020 = vrot.lane.b32.xlu0 %v1739, 113
    %v2021 = vpop.permute.xlu0 %2020
    %v2022 = vsel %vm1320, %v2007, %v2009
    %v2023 = vsel %vm1320, %v2009, %v2011
    %v2024 = vsel %vm1320, %v2011, %v2013
    %v2025 = vsel %vm1320, %v2015, %v2017
    %v2026 = vsel %vm1320, %v2017, %v2019
    %v2027 = vsel %vm1320, %v2019, %v2021
    %v2038 = vsel %vm1320, %v2013, %v2007
    %v2039 = vsel %vm1320, %v2021, %v2015
    %v2040 = vsel %vm1334, %v2022, 0.0
    %v2041 = vsel %vm1335, %v2023, 0.0
    %v2042 = vsel %vm1336, %v2024, 0.0
    %v2043 = vsel %vm1337, %v2038, 0.0
    %v2044 = vsel %vm1334, %v2025, 0.0
    %v2045 = vsel %vm1335, %v2026, 0.0
    %v2046 = vsel %vm1336, %v2027, 0.0
    %v2047 = vsel %vm1337, %v2039, 0.0
    %2048 = vst [vmem:[#allocation3 + $0x180] sm:$0xff] %v2040
    %2049 = vst [vmem:[#allocation3 + $0x188] sm:$0xff] %v2041
    %2050 = vst [vmem:[#allocation3 + $0x190] sm:$0xff] %v2042
    %2051 = vst [vmem:[#allocation3 + $0x198] sm:$0xff] %v2043
    %2052 = vst [vmem:[#allocation3 + $0x1a0] sm:$0xff] %v2044
    %2053 = vst [vmem:[#allocation3 + $0x1a8] sm:$0xff] %v2045
    %2054 = vst [vmem:[#allocation3 + $0x1b0] sm:$0xff] %v2046
    %2055 = vst [vmem:[#allocation3 + $0x1b8] sm:$0xff] %v2047
    %2056 = vrot.lane.b32.xlu0 %v1732, 112
    %v2057 = vpop.permute.xlu0 %2056
    %2058 = vrot.lane.b32.xlu0 %v1733, 112
    %v2059 = vpop.permute.xlu0 %2058
    %2060 = vrot.lane.b32.xlu0 %v1734, 112
    %v2061 = vpop.permute.xlu0 %2060
    %2062 = vrot.lane.b32.xlu0 %v1735, 112
    %v2063 = vpop.permute.xlu0 %2062
    %2064 = vrot.lane.b32.xlu0 %v1736, 112
    %v2065 = vpop.permute.xlu0 %2064
    %2066 = vrot.lane.b32.xlu0 %v1737, 112
    %v2067 = vpop.permute.xlu0 %2066
    %2068 = vrot.lane.b32.xlu0 %v1738, 112
    %v2069 = vpop.permute.xlu0 %2068
    %2070 = vrot.lane.b32.xlu0 %v1739, 112
    %v2071 = vpop.permute.xlu0 %2070
    %v2072 = vsel %vm1354, %v2057, %v2059
    %v2073 = vsel %vm1354, %v2059, %v2061
    %v2074 = vsel %vm1354, %v2061, %v2063
    %v2075 = vsel %vm1354, %v2065, %v2067
    %v2076 = vsel %vm1354, %v2067, %v2069
    %v2077 = vsel %vm1354, %v2069, %v2071
    %v2088 = vsel %vm1354, %v2063, %v2057
    %v2089 = vsel %vm1354, %v2071, %v2065
    %v2090 = vsel %vm1368, %v2072, 0.0
    %v2091 = vsel %vm1369, %v2073, 0.0
    %v2092 = vsel %vm1370, %v2074, 0.0
    %v2093 = vsel %vm1371, %v2088, 0.0
    %v2094 = vsel %vm1368, %v2075, 0.0
    %v2095 = vsel %vm1369, %v2076, 0.0
    %v2096 = vsel %vm1370, %v2077, 0.0
    %v2097 = vsel %vm1371, %v2089, 0.0
    %2098 = vst [vmem:[#allocation3 + $0x1c0] sm:$0xff] %v2090
    %2099 = vst [vmem:[#allocation3 + $0x1c8] sm:$0xff] %v2091
    %2100 = vst [vmem:[#allocation3 + $0x1d0] sm:$0xff] %v2092
    %2101 = vst [vmem:[#allocation3 + $0x1d8] sm:$0xff] %v2093
    %2102 = vst [vmem:[#allocation3 + $0x1e0] sm:$0xff] %v2094
    %2103 = vst [vmem:[#allocation3 + $0x1e8] sm:$0xff] %v2095
    %2104 = vst [vmem:[#allocation3 + $0x1f0] sm:$0xff] %v2096
    %2105 = vst [vmem:[#allocation3 + $0x1f8] sm:$0xff] %v2097
    %2106 = vrot.lane.b32.xlu0 %v1732, 111
    %v2107 = vpop.permute.xlu0 %2106
    %2108 = vrot.lane.b32.xlu0 %v1733, 111
    %v2109 = vpop.permute.xlu0 %2108
    %2110 = vrot.lane.b32.xlu0 %v1734, 111
    %v2111 = vpop.permute.xlu0 %2110
    %2112 = vrot.lane.b32.xlu0 %v1735, 111
    %v2113 = vpop.permute.xlu0 %2112
    %2114 = vrot.lane.b32.xlu0 %v1736, 111
    %v2115 = vpop.permute.xlu0 %2114
    %2116 = vrot.lane.b32.xlu0 %v1737, 111
    %v2117 = vpop.permute.xlu0 %2116
    %2118 = vrot.lane.b32.xlu0 %v1738, 111
    %v2119 = vpop.permute.xlu0 %2118
    %2120 = vrot.lane.b32.xlu0 %v1739, 111
    %v2121 = vpop.permute.xlu0 %2120
    %v2122 = vsel %vm1400, %v2107, %v2109
    %v2123 = vsel %vm1400, %v2109, %v2111
    %v2124 = vsel %vm1400, %v2111, %v2113
    %v2125 = vsel %vm1400, %v2115, %v2117
    %v2126 = vsel %vm1400, %v2117, %v2119
    %v2127 = vsel %vm1400, %v2119, %v2121
    %v2138 = vsel %vm1400, %v2113, %v2107
    %v2139 = vsel %vm1400, %v2121, %v2115
    %v2140 = vsel %vm1414, %v2122, 0.0
    %v2141 = vsel %vm1415, %v2123, 0.0
    %v2142 = vsel %vm1416, %v2124, 0.0
    %v2143 = vsel %vm1417, %v2138, 0.0
    %v2144 = vsel %vm1414, %v2125, 0.0
    %v2145 = vsel %vm1415, %v2126, 0.0
    %v2146 = vsel %vm1416, %v2127, 0.0
    %v2147 = vsel %vm1417, %v2139, 0.0
    %2148 = vst [vmem:[#allocation3 + $0x200] sm:$0xff] %v2140
    %2149 = vst [vmem:[#allocation3 + $0x208] sm:$0xff] %v2141
    %2150 = vst [vmem:[#allocation3 + $0x210] sm:$0xff] %v2142
    %2151 = vst [vmem:[#allocation3 + $0x218] sm:$0xff] %v2143
    %2152 = vst [vmem:[#allocation3 + $0x220] sm:$0xff] %v2144
    %2153 = vst [vmem:[#allocation3 + $0x228] sm:$0xff] %v2145
    %2154 = vst [vmem:[#allocation3 + $0x230] sm:$0xff] %v2146
    %2155 = vst [vmem:[#allocation3 + $0x238] sm:$0xff] %v2147
    %v2156 = vld [vmem:[%s7] sm:$0xff]
    %v2157 = vld [vmem:[#allocation3] sm:$0xff]
    %v2158 = vld [vmem:[#allocation3 + $0x8] sm:$0xff]
    %v2159 = vld [vmem:[#allocation3 + $0x10] sm:$0xff]
    %v2160 = vld [vmem:[#allocation3 + $0x18] sm:$0xff]
    %v2161 = vld [vmem:[#allocation3 + $0x20] sm:$0xff]
    %v2162 = vld [vmem:[#allocation3 + $0x28] sm:$0xff]
    %v2163 = vld [vmem:[#allocation3 + $0x30] sm:$0xff]
    %v2164 = vld [vmem:[#allocation3 + $0x38] sm:$0xff]
    %v2165 = vld [vmem:[#allocation3 + $0x40] sm:$0xff]
    %v2166 = vld [vmem:[#allocation3 + $0x48] sm:$0xff]
    %v2167 = vld [vmem:[#allocation3 + $0x50] sm:$0xff]
    %v2168 = vld [vmem:[#allocation3 + $0x58] sm:$0xff]
    %v2169 = vld [vmem:[#allocation3 + $0x60] sm:$0xff]
    %v2170 = vld [vmem:[#allocation3 + $0x68] sm:$0xff]
    %v2171 = vld [vmem:[#allocation3 + $0x70] sm:$0xff]
    %v2172 = vld [vmem:[#allocation3 + $0x78] sm:$0xff]
    %v2173 = vld [vmem:[#allocation3 + $0x80] sm:$0xff]
    %v2174 = vld [vmem:[#allocation3 + $0x88] sm:$0xff]
    %v2175 = vld [vmem:[#allocation3 + $0x90] sm:$0xff]
    %v2176 = vld [vmem:[#allocation3 + $0x98] sm:$0xff]
    %v2177 = vld [vmem:[#allocation3 + $0xa0] sm:$0xff]
    %v2178 = vld [vmem:[#allocation3 + $0xa8] sm:$0xff]
    %v2179 = vld [vmem:[#allocation3 + $0xb0] sm:$0xff]
    %v2180 = vld [vmem:[#allocation3 + $0xb8] sm:$0xff]
    %v2181 = vld [vmem:[#allocation3 + $0xc0] sm:$0xff]
    %v2182 = vld [vmem:[#allocation3 + $0xc8] sm:$0xff]
    %v2183 = vld [vmem:[#allocation3 + $0xd0] sm:$0xff]
    %v2184 = vld [vmem:[#allocation3 + $0xd8] sm:$0xff]
    %v2185 = vld [vmem:[#allocation3 + $0xe0] sm:$0xff]
    %v2186 = vld [vmem:[#allocation3 + $0xe8] sm:$0xff]
    %v2187 = vld [vmem:[#allocation3 + $0xf0] sm:$0xff]
    %v2188 = vld [vmem:[#allocation3 + $0xf8] sm:$0xff]
    %v2189 = vld [vmem:[#allocation3 + $0x100] sm:$0xff]
    %v2190 = vld [vmem:[#allocation3 + $0x108] sm:$0xff]
    %v2191 = vld [vmem:[#allocation3 + $0x110] sm:$0xff]
    %v2192 = vld [vmem:[#allocation3 + $0x118] sm:$0xff]
    %v2193 = vld [vmem:[#allocation3 + $0x120] sm:$0xff]
    %v2194 = vld [vmem:[#allocation3 + $0x128] sm:$0xff]
    %v2195 = vld [vmem:[#allocation3 + $0x130] sm:$0xff]
    %v2196 = vld [vmem:[#allocation3 + $0x138] sm:$0xff]
    %v2197 = vld [vmem:[#allocation3 + $0x140] sm:$0xff]
    %v2198 = vld [vmem:[#allocation3 + $0x148] sm:$0xff]
    %v2199 = vld [vmem:[#allocation3 + $0x150] sm:$0xff]
    %v2200 = vld [vmem:[#allocation3 + $0x158] sm:$0xff]
    %v2201 = vld [vmem:[#allocation3 + $0x160] sm:$0xff]
    %v2202 = vld [vmem:[#allocation3 + $0x168] sm:$0xff]
    %v2203 = vld [vmem:[#allocation3 + $0x170] sm:$0xff]
    %v2204 = vld [vmem:[#allocation3 + $0x178] sm:$0xff]
    %v2205 = vld [vmem:[#allocation3 + $0x180] sm:$0xff]
    %v2206 = vld [vmem:[#allocation3 + $0x188] sm:$0xff]
    %v2207 = vld [vmem:[#allocation3 + $0x190] sm:$0xff]
    %v2208 = vld [vmem:[#allocation3 + $0x198] sm:$0xff]
    %v2209 = vld [vmem:[#allocation3 + $0x1a0] sm:$0xff]
    %v2210 = vld [vmem:[#allocation3 + $0x1a8] sm:$0xff]
    %v2211 = vld [vmem:[#allocation3 + $0x1b0] sm:$0xff]
    %v2212 = vld [vmem:[#allocation3 + $0x1b8] sm:$0xff]
    %v2213 = vld [vmem:[#allocation3 + $0x1c0] sm:$0xff]
    %v2214 = vld [vmem:[#allocation3 + $0x1c8] sm:$0xff]
    %v2215 = vld [vmem:[#allocation3 + $0x1d0] sm:$0xff]
    %v2216 = vld [vmem:[#allocation3 + $0x1d8] sm:$0xff]
    %v2217 = vld [vmem:[#allocation3 + $0x1e0] sm:$0xff]
    %v2218 = vld [vmem:[#allocation3 + $0x1e8] sm:$0xff]
    %v2219 = vld [vmem:[#allocation3 + $0x1f0] sm:$0xff]
    %v2220 = vld [vmem:[#allocation3 + $0x1f8] sm:$0xff]
    %v2221 = vld [vmem:[#allocation3 + $0x200] sm:$0xff]
    %v2222 = vld [vmem:[#allocation3 + $0x208] sm:$0xff]
    %v2223 = vld [vmem:[#allocation3 + $0x210] sm:$0xff]
    %v2224 = vld [vmem:[#allocation3 + $0x218] sm:$0xff]
    %v2225 = vld [vmem:[#allocation3 + $0x220] sm:$0xff]
    %v2226 = vld [vmem:[#allocation3 + $0x228] sm:$0xff]
    %v2227 = vld [vmem:[#allocation3 + $0x230] sm:$0xff]
    %v2228 = vld [vmem:[#allocation3 + $0x238] sm:$0xff]
    %v2229 = vld [vmem:[%s8] sm:$0xf]
    %2231 = vset.pattern.permute.xlu0 0
    %2232 = vperm.xlu0 %2231, %v2229
    %v2233 = vpop.permute.xlu0 %2232
    %2236 = vst [vmem:[#allocation1] ss:$2 sm:$0xff] %v2156
    %v2237 = vld.sshfl [vmem:[#allocation1] sm:$0xff pattern:$0x75316420]
    %v2238 = vld.sshfl [vmem:[#allocation1 + $0x8] sm:$0xff pattern:$0x75316420]
    %v2240 = vsel %vm290, %v2238, 0
    %2242 = vmatpush.msra.mxu0 %v2217
    %2243 = vmatpush.msra.mxu0 %v2213
    %2244 = vmatpush.msra.mxu0 %v2209
    %2245 = vmatpush.msra.mxu0 %v2205
    %2246 = vmatpush.msra.mxu0 %v2201
    %2247 = vmatpush.msra.mxu0 %v2197
    %2248 = vmatpush.msra.mxu0 %v2193
    %2249 = vmatpush.msra.mxu0 %v2189
    %2250 = vmatpush.msra.mxu0 %v2185
    %2251 = vmatpush.msra.mxu0 %v2181
    %2252 = vmatpush.msra.mxu0 %v2177
    %2253 = vmatpush.msra.mxu0 %v2173
    %2254 = vmatpush.msra.mxu0 %v2169
    %2255 = vmatpush.msra.mxu0 %v2165
    %2256 = vmatpush.msra.mxu0 %v2161
    %2257 = vmatpush.msra.mxu0 %v2157
    %2258 = vmatmul.f32.gmra.mxu0 %v2237
    %v2259 = vpop.f32.mrf.mxu0
    %v2260 = vadd.f32 %v2233, %v2259
    %2261 = vdwg.mxu0
    %2262 = vmatpush.msra.mxu0 0.0
    %2263 = vmatpush.msra.mxu0 0.0
    %2264 = vmatpush.msra.mxu0 0.0
    %2265 = vmatpush.msra.mxu0 0.0
    %2266 = vmatpush.msra.mxu0 0.0
    %2267 = vmatpush.msra.mxu0 0.0
    %2268 = vmatpush.msra.mxu0 0.0
    %2269 = vmatpush.msra.mxu0 0.0
    %2270 = vmatpush.msra.mxu0 0.0
    %2271 = vmatpush.msra.mxu0 0.0
    %2272 = vmatpush.msra.mxu0 0.0
    %2273 = vmatpush.msra.mxu0 0.0
    %2274 = vmatpush.msra.mxu0 0.0
    %2275 = vmatpush.msra.mxu0 0.0
    %2276 = vmatpush.msra.mxu0 %v2225
    %2277 = vmatpush.msra.mxu0 %v2221
    %2278 = vmatmul.f32.gmra.mxu0 %v2240
    %v2279 = vpop.f32.mrf.mxu0
    %v2280 = vadd.f32 %v2260, %v2279
    %2281 = vdwg.mxu0
    %2282 = vmatpush.msra.mxu0 %v2218
    %2283 = vmatpush.msra.mxu0 %v2214
    %2284 = vmatpush.msra.mxu0 %v2210
    %2285 = vmatpush.msra.mxu0 %v2206
    %2286 = vmatpush.msra.mxu0 %v2202
    %2287 = vmatpush.msra.mxu0 %v2198
    %2288 = vmatpush.msra.mxu0 %v2194
    %2289 = vmatpush.msra.mxu0 %v2190
    %2290 = vmatpush.msra.mxu0 %v2186
    %2291 = vmatpush.msra.mxu0 %v2182
    %2292 = vmatpush.msra.mxu0 %v2178
    %2293 = vmatpush.msra.mxu0 %v2174
    %2294 = vmatpush.msra.mxu0 %v2170
    %2295 = vmatpush.msra.mxu0 %v2166
    %2296 = vmatpush.msra.mxu0 %v2162
    %2297 = vmatpush.msra.mxu0 %v2158
    %2298 = vmatmul.f32.gmra.mxu0 %v2237
    %v2299 = vpop.f32.mrf.mxu0
    %v2300 = vadd.f32 %v2233, %v2299
    %2301 = vdwg.mxu0
    %2302 = vmatpush.msra.mxu0 0.0
    %2303 = vmatpush.msra.mxu0 0.0
    %2304 = vmatpush.msra.mxu0 0.0
    %2305 = vmatpush.msra.mxu0 0.0
    %2306 = vmatpush.msra.mxu0 0.0
    %2307 = vmatpush.msra.mxu0 0.0
    %2308 = vmatpush.msra.mxu0 0.0
    %2309 = vmatpush.msra.mxu0 0.0
    %2310 = vmatpush.msra.mxu0 0.0
    %2311 = vmatpush.msra.mxu0 0.0
    %2312 = vmatpush.msra.mxu0 0.0
    %2313 = vmatpush.msra.mxu0 0.0
    %2314 = vmatpush.msra.mxu0 0.0
    %2315 = vmatpush.msra.mxu0 0.0
    %2316 = vmatpush.msra.mxu0 %v2226
    %2317 = vmatpush.msra.mxu0 %v2222
    %2318 = vmatmul.f32.gmra.mxu0 %v2240
    %v2319 = vpop.f32.mrf.mxu0
    %v2320 = vadd.f32 %v2300, %v2319
    %2321 = vdwg.mxu0
    %2322 = vmatpush.msra.mxu0 %v2219
    %2323 = vmatpush.msra.mxu0 %v2215
    %2324 = vmatpush.msra.mxu0 %v2211
    %2325 = vmatpush.msra.mxu0 %v2207
    %2326 = vmatpush.msra.mxu0 %v2203
    %2327 = vmatpush.msra.mxu0 %v2199
    %2328 = vmatpush.msra.mxu0 %v2195
    %2329 = vmatpush.msra.mxu0 %v2191
    %2330 = vmatpush.msra.mxu0 %v2187
    %2331 = vmatpush.msra.mxu0 %v2183
    %2332 = vmatpush.msra.mxu0 %v2179
    %2333 = vmatpush.msra.mxu0 %v2175
    %2334 = vmatpush.msra.mxu0 %v2171
    %2335 = vmatpush.msra.mxu0 %v2167
    %2336 = vmatpush.msra.mxu0 %v2163
    %2337 = vmatpush.msra.mxu0 %v2159
    %2338 = vmatmul.f32.gmra.mxu0 %v2237
    %v2339 = vpop.f32.mrf.mxu0
    %v2340 = vadd.f32 %v2233, %v2339
    %2341 = vdwg.mxu0
    %2342 = vmatpush.msra.mxu0 0.0
    %2343 = vmatpush.msra.mxu0 0.0
    %2344 = vmatpush.msra.mxu0 0.0
    %2345 = vmatpush.msra.mxu0 0.0
    %2346 = vmatpush.msra.mxu0 0.0
    %2347 = vmatpush.msra.mxu0 0.0
    %2348 = vmatpush.msra.mxu0 0.0
    %2349 = vmatpush.msra.mxu0 0.0
    %2350 = vmatpush.msra.mxu0 0.0
    %2351 = vmatpush.msra.mxu0 0.0
    %2352 = vmatpush.msra.mxu0 0.0
    %2353 = vmatpush.msra.mxu0 0.0
    %2354 = vmatpush.msra.mxu0 0.0
    %2355 = vmatpush.msra.mxu0 0.0
    %2356 = vmatpush.msra.mxu0 %v2227
    %2357 = vmatpush.msra.mxu0 %v2223
    %2358 = vmatmul.f32.gmra.mxu0 %v2240
    %v2359 = vpop.f32.mrf.mxu0
    %v2360 = vadd.f32 %v2340, %v2359
    %2361 = vdwg.mxu0
    %2362 = vmatpush.msra.mxu0 %v2220
    %2363 = vmatpush.msra.mxu0 %v2216
    %2364 = vmatpush.msra.mxu0 %v2212
    %2365 = vmatpush.msra.mxu0 %v2208
    %2366 = vmatpush.msra.mxu0 %v2204
    %2367 = vmatpush.msra.mxu0 %v2200
    %2368 = vmatpush.msra.mxu0 %v2196
    %2369 = vmatpush.msra.mxu0 %v2192
    %2370 = vmatpush.msra.mxu0 %v2188
    %2371 = vmatpush.msra.mxu0 %v2184
    %2372 = vmatpush.msra.mxu0 %v2180
    %2373 = vmatpush.msra.mxu0 %v2176
    %2374 = vmatpush.msra.mxu0 %v2172
    %2375 = vmatpush.msra.mxu0 %v2168
    %2376 = vmatpush.msra.mxu0 %v2164
    %2377 = vmatpush.msra.mxu0 %v2160
    %2378 = vmatmul.f32.gmra.mxu0 %v2237
    %v2379 = vpop.f32.mrf.mxu0
    %v2380 = vadd.f32 %v2233, %v2379
    %2381 = vdwg.mxu0
    %2382 = vmatpush.msra.mxu0 0.0
    %2383 = vmatpush.msra.mxu0 0.0
    %2384 = vmatpush.msra.mxu0 0.0
    %2385 = vmatpush.msra.mxu0 0.0
    %2386 = vmatpush.msra.mxu0 0.0
    %2387 = vmatpush.msra.mxu0 0.0
    %2388 = vmatpush.msra.mxu0 0.0
    %2389 = vmatpush.msra.mxu0 0.0
    %2390 = vmatpush.msra.mxu0 0.0
    %2391 = vmatpush.msra.mxu0 0.0
    %2392 = vmatpush.msra.mxu0 0.0
    %2393 = vmatpush.msra.mxu0 0.0
    %2394 = vmatpush.msra.mxu0 0.0
    %2395 = vmatpush.msra.mxu0 0.0
    %2396 = vmatpush.msra.mxu0 %v2228
    %2397 = vmatpush.msra.mxu0 %v2224
    %2398 = vmatmul.f32.gmra.mxu0 %v2240
    %v2399 = vpop.f32.mrf.mxu0
    %v2400 = vadd.f32 %v2380, %v2399
    %2401 = vdwg.mxu0
    %v2402 = vsub.f32 %v1077, %v2280
    %v2403 = vsub.f32 %v1078, %v2320
    %v2404 = vsub.f32 %v1083, %v2360
    %v2405 = vsub.f32 %v1084, %v2400
    %v2406 = vmul.f32 %v2402, %v2402
    %v2407 = vmul.f32 %v2403, %v2403
    %v2408 = vmul.f32 %v2404, %v2404
    %v2409 = vmul.f32 %v2405, %v2405
    %v2410 = vsel %vm1467, %v2406, 0.0
    %v2411 = vsel %vm1467, %v2407, 0.0
    %v2412 = vadd.f32 %v2410, %v2411
    %v2413 = vsel %vm1467, %v2408, 0.0
    %v2414 = vadd.f32 %v2412, %v2413
    %v2415 = vsel %vm1467, %v2409, 0.0
    %v2416 = vadd.f32 %v2414, %v2415
    %2417 = vadd.xlane.f32.xlu0 %v2416
    %v2418 = vpop.xlane.xlu0 %2417
    %v2419 = vrot.slane %v2418, 4
    %v2420 = vadd.f32 %v2418, %v2419
    %v2421 = vrot.slane %v2420, 2
    %v2422 = vadd.f32 %v2420, %v2421
    %v2423 = vrot.slane %v2422, 1
    %v2424 = vadd.f32 %v2422, %v2423
    %s2425 = vtos %v2424
    %s2426 = smul.f32 %s2425, 0.00048828125
    %v2427 = vstv %s2426
    %vm2428 = vcmask 0
    %2429 = vst.msk [vmem:[#allocation10] sm:$0x1] %vm2428, %v2427
    // Predicated region
    $region54: #{diffusion_forward.17} parent=1 // pred_check
      _
    $region55: #{diffusion_forward.17} parent=1 // pred_check_branch
      %2431 = sbr.rel (0) target = $region57
    $region56: #{diffusion_forward.17} parent=1 // pred_region
      %2433 = vsyncadd [#allocation5], 0
      %s2435 = sshll.u32 [#allocation10], 4
      %s2436 = int_to_ptr.vmem [resolvable:$true] %s2435
      %s2437 = sshll.u32 %s10, 4
      %s2438 = int_to_ptr.hbm [resolvable:$true] %s2437
      %2440 = dma.vmem_to_hbm [thread:$0]  %s2436, 16, %s2438, [#allocation5]
    $region57: #{diffusion_forward.17} parent=1 // pred_fallthru
      _
    // Predicated region
    $region58: #{diffusion_forward.17} parent=1 // pred_check
      _
    $region59: #{diffusion_forward.17} parent=1 // pred_check_branch
      %2442 = sbr.rel (0) target = $region61
    $region60: #{diffusion_forward.17} parent=1 // pred_region
      %2444 = dma.done [#allocation5], 16
    $region61: #{diffusion_forward.17} parent=1 // pred_fallthru
      _
    %2445 = vsyncpa [#allocation5], 1
    %2446 = vsyncpa [#allocation6], 1
    %2447 = vsyncpa [#allocation8], 1

</llo_original>
